<compile_context>
chip_gen: v7x
topology: tpu7x:2x2x1
jax: 0.10.0
libtpu: 0.0.40
codegen_flags: <defaults>
</compile_context>

<pallas_src>
import numpy as np

import jax
import jax.numpy as jnp
from jax.experimental import pallas as pl
from jax.experimental.pallas import tpu as pltpu


def _round_up(x, m):
    return ((x + m - 1) // m) * m


def _compiler_params(dims):
    vmem_limit = None
    try:
        cap = int(pltpu.get_tpu_info().vmem_capacity_bytes)
        vmem_limit = min(96 * 1024 * 1024, cap * 3 // 4)
    except Exception:  # best-effort hardware query
        vmem_limit = None
    return pltpu.CompilerParams(
        dimension_semantics=dims, vmem_limit_bytes=vmem_limit)


# ----------------------------------------------------------------------------
# Glue: im2col for a 3x3 / stride-2 / pad-1 conv.
# cols[n, ho*Wo + wo, (kh*3+kw)*C + c] = x_padded[n, 2*ho + kh, 2*wo + kw, c]
# (bf16, built once per block in XLA; the kernel then does a single matmul
#  with K = 9*C against a (9*C, C_out) weight.)
# ----------------------------------------------------------------------------
def _im2col_s2(x_nhwc):
    n, h, w, c = x_nhwc.shape
    ho, wo = (h + 1) // 2, (w + 1) // 2
    xp = jnp.pad(x_nhwc, ((0, 0), (1, 2), (1, 2), (0, 0)))
    taps = []
    for kh in range(3):
        for kw in range(3):
            taps.append(xp[:, kh:kh + 2 * ho:2, kw:kw + 2 * wo:2, :])
    cols = jnp.concatenate(taps, axis=-1)               # (N, Ho, Wo, 9C)
    cols = cols.reshape(n, ho * wo, 9 * c).astype(jnp.bfloat16)
    return cols, ho, wo


# ----------------------------------------------------------------------------
# Kernel 1: conv (single K=9*Cin matmul) + bias + LeakyReLU(0.2), M-tiled.
# ----------------------------------------------------------------------------
def _conv_bias_lrelu_kernel(x_ref, w_ref, b_ref, o_ref):
    acc = jnp.dot(x_ref[...], w_ref[...], preferred_element_type=jnp.float32)
    y = acc + b_ref[...]
    y = jnp.where(y >= 0.0, y, 0.2 * y)
    o_ref[...] = y.astype(o_ref.dtype)


def conv_bias_lrelu(cols, w, b, *, m_tile_max=256):
    n, m, k = cols.shape
    cout = w.shape[-1]
    m_tile = min(m_tile_max, _round_up(m, 8))
    m_pad = _round_up(m, m_tile)
    if m_pad > m:
        cols = jnp.pad(cols, ((0, 0), (0, m_pad - m), (0, 0)))
    mt = m_pad // m_tile

    flops = 2 * n * m_pad * k * cout
    bytes_accessed = (cols.size * 2 + w.size * 2 + b.size * 4
                      + n * m_pad * cout * 2)
    cost = pl.CostEstimate(flops=int(flops), transcendentals=0,
                           bytes_accessed=int(bytes_accessed))

    return pl.pallas_call(
        _conv_bias_lrelu_kernel,
        out_shape=jax.ShapeDtypeStruct((n, m_pad, cout), jnp.bfloat16),
        grid=(n, mt),
        in_specs=[
            pl.BlockSpec((None, m_tile, k), lambda i, j: (i, j, 0)),
            # Grid-invariant operands (fetched once).
            # TODO(synk): single-buffer via pipeline_mode=pl.Buffered(1) once
            # confirmed supported on the target toolchain.
            pl.BlockSpec((k, cout), lambda i, j: (0, 0)),
            pl.BlockSpec((1, cout), lambda i, j: (0, 0)),
        ],
        out_specs=pl.BlockSpec((None, m_tile, cout), lambda i, j: (i, j, 0)),
        compiler_params=_compiler_params(("parallel", "parallel")),
        cost_estimate=cost,
    )(cols, w, b)


# ----------------------------------------------------------------------------
# Kernel 2: conv (single K=9*Cin matmul) + InstanceNorm + LeakyReLU(0.2),
# optionally fused with the final 1x1 projection (lane-dense 128-wide output).
# One sample per grid step (per-sample, per-channel statistics).
# TODO(synk): for very large images, split this into an M-tiled stats pass +
# an M-tiled normalize pass (streamed sum/sumsq) to bound VMEM on v7x, and add
# a C_out-tile parallel axis so both v7x TensorCores stay busy at small N.
# ----------------------------------------------------------------------------
def _make_in_block_kernel(proj):
    def kernel(*refs):
        if proj:
            x_ref, w_ref, mask_ref, wp_ref, bp_ref, o_ref = refs
        else:
            x_ref, w_ref, mask_ref, o_ref = refs

        acc = jnp.dot(x_ref[...], w_ref[...],
                      preferred_element_type=jnp.float32)     # (M, Cout) f32
        # InstanceNorm2d (eps=1e-5, no affine).  mask = 1/(Ho*Wo) on valid
        # rows, 0 on layout padding.  Variance clamped at 0 (cancellation).
        mw = mask_ref[...]                                    # (M, 1)
        ym = acc * mw
        mean = jnp.sum(ym, axis=0, keepdims=True)             # (1, Cout)
        ex2 = jnp.sum(ym * acc, axis=0, keepdims=True)        # (1, Cout)
        var = jnp.maximum(ex2 - mean * mean, 0.0)
        y = (acc - mean) * jax.lax.rsqrt(var + 1e-5)
        y = jnp.where(y >= 0.0, y, 0.2 * y)
        if proj:
            y = jnp.dot(y.astype(jnp.bfloat16), wp_ref[...],
                        preferred_element_type=jnp.float32) + bp_ref[...]
        o_ref[...] = y.astype(o_ref.dtype)

    return kernel


def conv_in_lrelu(cols, w, *, proj_w=None, proj_b=None):
    n, m, k = cols.shape
    cout = w.shape[-1]
    proj = proj_w is not None
    c_final = proj_w.shape[-1] if proj else cout
    m_pad = _round_up(m, 8)
    if m_pad > m:
        cols = jnp.pad(cols, ((0, 0), (0, m_pad - m), (0, 0)))

    mask_np = np.zeros((m_pad, 1), np.float32)
    mask_np[:m, 0] = 1.0 / float(m)
    mask = jnp.asarray(mask_np)

    kernel = _make_in_block_kernel(proj)
    in_specs = [
        pl.BlockSpec((None, m_pad, k), lambda i: (i, 0, 0)),
        pl.BlockSpec((k, cout), lambda i: (0, 0)),
        pl.BlockSpec((m_pad, 1), lambda i: (0, 0)),
    ]
    args = [cols, w, mask]
    if proj:
        in_specs += [pl.BlockSpec(proj_w.shape, lambda i: (0, 0)),
                     pl.BlockSpec((1, c_final), lambda i: (0, 0))]
        args += [proj_w, proj_b]
    out_dtype = jnp.float32 if proj else jnp.bfloat16

    flops = 2 * n * m_pad * k * cout
    if proj:
        flops += 2 * n * m_pad * cout * c_final
    bytes_accessed = (cols.size * 2 + w.size * 2
                      + n * m_pad * c_final * jnp.dtype(out_dtype).itemsize)
    cost = pl.CostEstimate(flops=int(flops), transcendentals=int(n * cout),
                           bytes_accessed=int(bytes_accessed))

    return pl.pallas_call(
        kernel,
        out_shape=jax.ShapeDtypeStruct((n, m_pad, c_final), out_dtype),
        grid=(n,),
        in_specs=in_specs,
        out_specs=pl.BlockSpec((None, m_pad, c_final), lambda i: (i, 0, 0)),
        compiler_params=_compiler_params(("parallel",)),
        cost_estimate=cost,
    )(*args)


# ----------------------------------------------------------------------------
# Deterministic parameters.
# conv3x3 weights are stored merged-K: (9*C_in, C_out), i.e. the PyTorch
# (C_out, C_in, 3, 3) weight as .permute(2, 3, 1, 0).reshape(9*C_in, C_out),
# matching the im2col tap order (kh, kw, cin).  Block-1 output channels are
# zero-padded 64 -> 128 for lane-dense stores; the final 1x1 weight/bias are
# zero-padded (256,1)->(256,128) so its output is lane-dense (column 0 real).
# ----------------------------------------------------------------------------
def init_params(key, channels):
    ks = jax.random.split(key, 6)

    def conv_w(k, cin, cout):
        fan_in = cin * 9
        w = jax.random.normal(k, (9 * cin, cout), jnp.float32) / np.sqrt(fan_in)
        return w.astype(jnp.bfloat16)

    w1 = conv_w(ks[0], channels, 64)
    b1 = 0.01 * jax.random.normal(ks[1], (1, 64), jnp.float32)
    w4 = jax.random.normal(ks[4], (256, 1), jnp.float32) / np.sqrt(256.0)
    b4 = 0.01 * jax.random.normal(ks[5], (1, 1), jnp.float32)
    return {
        "w1": jnp.pad(w1, ((0, 0), (0, 64))),            # (27, 128), cols 64+ zero
        "b1": jnp.pad(b1, ((0, 0), (0, 64))),            # (1, 128)
        "w2": conv_w(ks[2], 64, 128),                     # (576, 128)
        "w3": conv_w(ks[3], 128, 256),                    # (1152, 256)
        "w4p": jnp.pad(w4, ((0, 0), (0, 127))).astype(jnp.bfloat16),
        "b4p": jnp.pad(b4, ((0, 0), (0, 127))),
    }


# ----------------------------------------------------------------------------
# Full Discriminator forward (NCHW in -> NCHW out, matching the PyTorch spec).
# ----------------------------------------------------------------------------
@jax.jit
def discriminator_forward(img_nchw, params):
    x = jnp.transpose(img_nchw, (0, 2, 3, 1)).astype(jnp.bfloat16)  # NHWC bf16

    # DisBlock 1: conv(ch -> 64) + bias + LeakyReLU(0.2)   (no norm, M-tiled)
    cols, ho, wo = _im2col_s2(x)
    y = conv_bias_lrelu(cols, params["w1"], params["b1"])
    x = y[:, :ho * wo, :64].reshape(-1, ho, wo, 64)

    # DisBlock 2: conv(64 -> 128) + InstanceNorm + LeakyReLU(0.2)
    cols, ho, wo = _im2col_s2(x)
    y = conv_in_lrelu(cols, params["w2"])
    x = y[:, :ho * wo, :].reshape(-1, ho, wo, 128)

    # DisBlock 3 + final 1x1 conv (fused): conv(128 -> 256) + IN + LeakyReLU,
    # then the 256 -> 1 projection written lane-dense (column 0 is real).
    cols, ho, wo = _im2col_s2(x)
    y = conv_in_lrelu(cols, params["w3"],
                      proj_w=params["w4p"], proj_b=params["b4p"])
    out = y[:, :ho * wo, :1].reshape(-1, ho, wo, 1).astype(jnp.float32)

    return jnp.transpose(out, (0, 3, 1, 2))               # (N, 1, H/8, W/8)


if __name__ == "__main__":
    key = jax.random.PRNGKey(0)
    k_img, k_par = jax.random.split(key)

    # Small shapes consistent with the module: batch=2, channels=3, 16x16.
    channels, height, width = 3, 16, 16
    img = jax.random.normal(k_img, (2, channels, height, width), jnp.float32)
    params = init_params(k_par, channels)

    out = discriminator_forward(img, params)
    out = jax.block_until_ready(out)

    expected = (2, 1, height // 8, width // 8)
    assert out.shape == expected, (out.shape, expected)
    assert bool(jnp.all(jnp.isfinite(out)))
    print("KERNEL_OK")
</pallas_src>

<mosaic_0001>
module attributes {stable_mosaic.version = 11 : i64} {
  func.func @_conv_bias_lrelu_kernel(%arg0: i32, %arg1: i32, %arg2: memref<1x64x27xbf16, #tpu.memory_space<vmem>>, %arg3: memref<27x128xbf16, #tpu.memory_space<vmem>>, %arg4: memref<1x128xf32, #tpu.memory_space<vmem>>, %arg5: memref<1x64x128xbf16, #tpu.memory_space<vmem>>) attributes {dimension_semantics = [#tpu.dimension_semantics<parallel>, #tpu.dimension_semantics<parallel>], iteration_bounds = array<i64: 2, 1>, scalar_prefetch = 0 : i64, scratch_operands = 0 : i64, tpu.core_type = #tpu.core_type<tc>, window_params = [{transform_indices = @transform_0, window_bounds = array<i64: 1, 64, 27>}, {pipeline_mode = #tpu.pipeline_mode<synchronous>, transform_indices = @transform_1, window_bounds = array<i64: 27, 128>}, {pipeline_mode = #tpu.pipeline_mode<synchronous>, transform_indices = @transform_2, window_bounds = array<i64: 1, 128>}, {transform_indices = @transform_3, window_bounds = array<i64: 1, 64, 128>}]} {
    %c0 = arith.constant 0 : index
    %c0_0 = arith.constant 0 : index
    %c0_1 = arith.constant 0 : index
    %0 = vector.load %arg2[%c0, %c0_0, %c0_1] : memref<1x64x27xbf16, #tpu.memory_space<vmem>>, vector<1x64x27xbf16>
    %1 = vector.shape_cast %0 : vector<1x64x27xbf16> to vector<64x27xbf16>
    %c0_2 = arith.constant 0 : index
    %c0_3 = arith.constant 0 : index
    %2 = vector.load %arg3[%c0_2, %c0_3] : memref<27x128xbf16, #tpu.memory_space<vmem>>, vector<27x128xbf16>
    %cst = arith.constant dense<0.000000e+00> : vector<64x128xf32>
    %3 = tpu.matmul %1, %2, %cst {dimension_numbers = #tpu.dot_dimension_numbers<[1], [0], [0], [1], [0, 0, 1, 1], [], []>} : vector<64x27xbf16>, vector<27x128xbf16>, vector<64x128xf32> -> vector<64x128xf32>
    %c0_4 = arith.constant 0 : index
    %c0_5 = arith.constant 0 : index
    %4 = vector.load %arg4[%c0_4, %c0_5] : memref<1x128xf32, #tpu.memory_space<vmem>>, vector<1x128xf32>
    %5 = vector.broadcast %4 : vector<1x128xf32> to vector<64x128xf32>
    %6 = arith.addf %3, %5 : vector<64x128xf32>
    %cst_6 = arith.constant 0.000000e+00 : f32
    %7 = vector.broadcast %cst_6 : f32 to vector<64x128xf32>
    %8 = arith.cmpf oge, %6, %7 : vector<64x128xf32>
    %cst_7 = arith.constant 2.000000e-01 : f32
    %9 = vector.broadcast %cst_7 : f32 to vector<64x128xf32>
    %10 = arith.mulf %9, %6 : vector<64x128xf32>
    %11 = arith.select %8, %6, %10 : vector<64x128xi1>, vector<64x128xf32>
    %12 = arith.truncf %11 : vector<64x128xf32> to vector<64x128xbf16>
    %c0_8 = arith.constant 0 : index
    %c0_9 = arith.constant 0 : index
    %c0_10 = arith.constant 0 : index
    %13 = vector.load %arg5[%c0_8, %c0_9, %c0_10] : memref<1x64x128xbf16, #tpu.memory_space<vmem>>, vector<1x64x128xbf16>
    %14 = vector.shape_cast %13 : vector<1x64x128xbf16> to vector<64x128xbf16>
    %15 = vector.shape_cast %12 : vector<64x128xbf16> to vector<1x64x128xbf16>
    tpu.vector_store %arg5[%c0_8, %c0_9, %c0_10], %15 {strides = array<i32>} : memref<1x64x128xbf16, #tpu.memory_space<vmem>>, vector<1x64x128xbf16>,
    return
  }
  func.func @transform_0(%arg0: i32, %arg1: i32) -> (i32, i32, i32) {
    %c0_i32 = arith.constant 0 : i32
    %c0_i32_0 = arith.constant 0 : i32
    return %arg0, %arg1, %c0_i32 : i32, i32, i32
  }
  func.func @transform_1(%arg0: i32, %arg1: i32) -> (i32, i32) {
    %c0_i32 = arith.constant 0 : i32
    %c0_i32_0 = arith.constant 0 : i32
    %c0_i32_1 = arith.constant 0 : i32
    return %c0_i32, %c0_i32_0 : i32, i32
  }
  func.func @transform_2(%arg0: i32, %arg1: i32) -> (i32, i32) {
    %c0_i32 = arith.constant 0 : i32
    %c0_i32_0 = arith.constant 0 : i32
    %c0_i32_1 = arith.constant 0 : i32
    return %c0_i32, %c0_i32_0 : i32, i32
  }
  func.func @transform_3(%arg0: i32, %arg1: i32) -> (i32, i32, i32) {
    %c0_i32 = arith.constant 0 : i32
    %c0_i32_0 = arith.constant 0 : i32
    return %arg0, %arg1, %c0_i32 : i32, i32, i32
  }
}

module attributes {stable_mosaic.version = 11 : i64} {
  func.func @kernel(%arg0: i32, %arg1: memref<1x16x576xbf16, #tpu.memory_space<vmem>>, %arg2: memref<576x128xbf16, #tpu.memory_space<vmem>>, %arg3: memref<16x1xf32, #tpu.memory_space<vmem>>, %arg4: memref<1x16x128xbf16, #tpu.memory_space<vmem>>) attributes {dimension_semantics = [#tpu.dimension_semantics<parallel>], iteration_bounds = array<i64: 2>, scalar_prefetch = 0 : i64, scratch_operands = 0 : i64, tpu.core_type = #tpu.core_type<tc>, window_params = [{transform_indices = @transform_0, window_bounds = array<i64: 1, 16, 576>}, {pipeline_mode = #tpu.pipeline_mode<synchronous>, transform_indices = @transform_1, window_bounds = array<i64: 576, 128>}, {pipeline_mode = #tpu.pipeline_mode<synchronous>, transform_indices = @transform_2, window_bounds = array<i64: 16, 1>}, {transform_indices = @transform_3, window_bounds = array<i64: 1, 16, 128>}]} {
    %c0 = arith.constant 0 : index
    %c0_0 = arith.constant 0 : index
    %c0_1 = arith.constant 0 : index
    %0 = vector.load %arg1[%c0, %c0_0, %c0_1] : memref<1x16x576xbf16, #tpu.memory_space<vmem>>, vector<1x16x576xbf16>
    %1 = vector.shape_cast %0 : vector<1x16x576xbf16> to vector<16x576xbf16>
    %c0_2 = arith.constant 0 : index
    %c0_3 = arith.constant 0 : index
    %2 = vector.load %arg2[%c0_2, %c0_3] : memref<576x128xbf16, #tpu.memory_space<vmem>>, vector<576x128xbf16>
    %cst = arith.constant dense<0.000000e+00> : vector<16x128xf32>
    %3 = tpu.matmul %1, %2, %cst {dimension_numbers = #tpu.dot_dimension_numbers<[1], [0], [0], [1], [0, 0, 1, 1], [], []>} : vector<16x576xbf16>, vector<576x128xbf16>, vector<16x128xf32> -> vector<16x128xf32>
    %c0_4 = arith.constant 0 : index
    %c0_5 = arith.constant 0 : index
    %4 = vector.load %arg3[%c0_4, %c0_5] : memref<16x1xf32, #tpu.memory_space<vmem>>, vector<16x1xf32>
    %5 = vector.broadcast %4 : vector<16x1xf32> to vector<16x128xf32>
    %6 = arith.mulf %3, %5 : vector<16x128xf32>
    %cst_6 = arith.constant dense<0.000000e+00> : vector<128xf32>
    %7 = vector.multi_reduction <add>, %6, %cst_6 [0] : vector<16x128xf32> to vector<128xf32>
    %8 = vector.shape_cast %7 : vector<128xf32> to vector<1x128xf32>
    %9 = arith.mulf %6, %3 : vector<16x128xf32>
    %cst_7 = arith.constant dense<0.000000e+00> : vector<128xf32>
    %10 = vector.multi_reduction <add>, %9, %cst_7 [0] : vector<16x128xf32> to vector<128xf32>
    %11 = vector.shape_cast %10 : vector<128xf32> to vector<1x128xf32>
    %12 = arith.mulf %8, %8 : vector<1x128xf32>
    %13 = arith.subf %11, %12 : vector<1x128xf32>
    %cst_8 = arith.constant 0.000000e+00 : f32
    %14 = vector.broadcast %cst_8 : f32 to vector<1x128xf32>
    %15 = arith.maximumf %13, %14 : vector<1x128xf32>
    %16 = vector.broadcast %8 : vector<1x128xf32> to vector<16x128xf32>
    %17 = arith.subf %3, %16 : vector<16x128xf32>
    %cst_9 = arith.constant 9.99999974E-6 : f32
    %18 = vector.broadcast %cst_9 : f32 to vector<1x128xf32>
    %19 = arith.addf %15, %18 : vector<1x128xf32>
    %20 = math.rsqrt %19 : vector<1x128xf32>
    %21 = vector.broadcast %20 : vector<1x128xf32> to vector<16x128xf32>
    %22 = arith.mulf %17, %21 : vector<16x128xf32>
    %cst_10 = arith.constant 0.000000e+00 : f32
    %23 = vector.broadcast %cst_10 : f32 to vector<16x128xf32>
    %24 = arith.cmpf oge, %22, %23 : vector<16x128xf32>
    %cst_11 = arith.constant 2.000000e-01 : f32
    %25 = vector.broadcast %cst_11 : f32 to vector<16x128xf32>
    %26 = arith.mulf %25, %22 : vector<16x128xf32>
    %27 = arith.select %24, %22, %26 : vector<16x128xi1>, vector<16x128xf32>
    %28 = arith.truncf %27 : vector<16x128xf32> to vector<16x128xbf16>
    %c0_12 = arith.constant 0 : index
    %c0_13 = arith.constant 0 : index
    %c0_14 = arith.constant 0 : index
    %29 = vector.load %arg4[%c0_12, %c0_13, %c0_14] : memref<1x16x128xbf16, #tpu.memory_space<vmem>>, vector<1x16x128xbf16>
    %30 = vector.shape_cast %29 : vector<1x16x128xbf16> to vector<16x128xbf16>
    %31 = vector.shape_cast %28 : vector<16x128xbf16> to vector<1x16x128xbf16>
    tpu.vector_store %arg4[%c0_12, %c0_13, %c0_14], %31 {strides = array<i32>} : memref<1x16x128xbf16, #tpu.memory_space<vmem>>, vector<1x16x128xbf16>,
    return
  }
  func.func @transform_0(%arg0: i32) -> (i32, i32, i32) {
    %c0_i32 = arith.constant 0 : i32
    %c0_i32_0 = arith.constant 0 : i32
    %c0_i32_1 = arith.constant 0 : i32
    return %arg0, %c0_i32, %c0_i32_0 : i32, i32, i32
  }
  func.func @transform_1(%arg0: i32) -> (i32, i32) {
    %c0_i32 = arith.constant 0 : i32
    %c0_i32_0 = arith.constant 0 : i32
    %c0_i32_1 = arith.constant 0 : i32
    return %c0_i32, %c0_i32_0 : i32, i32
  }
  func.func @transform_2(%arg0: i32) -> (i32, i32) {
    %c0_i32 = arith.constant 0 : i32
    %c0_i32_0 = arith.constant 0 : i32
    %c0_i32_1 = arith.constant 0 : i32
    return %c0_i32, %c0_i32_0 : i32, i32
  }
  func.func @transform_3(%arg0: i32) -> (i32, i32, i32) {
    %c0_i32 = arith.constant 0 : i32
    %c0_i32_0 = arith.constant 0 : i32
    %c0_i32_1 = arith.constant 0 : i32
    return %arg0, %c0_i32, %c0_i32_0 : i32, i32, i32
  }
}

module attributes {stable_mosaic.version = 11 : i64} {
  func.func @kernel(%arg0: i32, %arg1: memref<1x8x1152xbf16, #tpu.memory_space<vmem>>, %arg2: memref<1152x256xbf16, #tpu.memory_space<vmem>>, %arg3: memref<8x1xf32, #tpu.memory_space<vmem>>, %arg4: memref<256x128xbf16, #tpu.memory_space<vmem>>, %arg5: memref<1x128xf32, #tpu.memory_space<vmem>>, %arg6: memref<1x8x128xf32, #tpu.memory_space<vmem>>) attributes {dimension_semantics = [#tpu.dimension_semantics<parallel>], iteration_bounds = array<i64: 2>, scalar_prefetch = 0 : i64, scratch_operands = 0 : i64, tpu.core_type = #tpu.core_type<tc>, window_params = [{transform_indices = @transform_0, window_bounds = array<i64: 1, 8, 1152>}, {pipeline_mode = #tpu.pipeline_mode<synchronous>, transform_indices = @transform_1, window_bounds = array<i64: 1152, 256>}, {pipeline_mode = #tpu.pipeline_mode<synchronous>, transform_indices = @transform_2, window_bounds = array<i64: 8, 1>}, {pipeline_mode = #tpu.pipeline_mode<synchronous>, transform_indices = @transform_3, window_bounds = array<i64: 256, 128>}, {pipeline_mode = #tpu.pipeline_mode<synchronous>, transform_indices = @transform_4, window_bounds = array<i64: 1, 128>}, {transform_indices = @transform_5, window_bounds = array<i64: 1, 8, 128>}]} {
    %c0 = arith.constant 0 : index
    %c0_0 = arith.constant 0 : index
    %c0_1 = arith.constant 0 : index
    %0 = vector.load %arg1[%c0, %c0_0, %c0_1] : memref<1x8x1152xbf16, #tpu.memory_space<vmem>>, vector<1x8x1152xbf16>
    %1 = vector.shape_cast %0 : vector<1x8x1152xbf16> to vector<8x1152xbf16>
    %c0_2 = arith.constant 0 : index
    %c0_3 = arith.constant 0 : index
    %2 = vector.load %arg2[%c0_2, %c0_3] : memref<1152x256xbf16, #tpu.memory_space<vmem>>, vector<1152x256xbf16>
    %cst = arith.constant dense<0.000000e+00> : vector<8x256xf32>
    %3 = tpu.matmul %1, %2, %cst {dimension_numbers = #tpu.dot_dimension_numbers<[1], [0], [0], [1], [0, 0, 1, 1], [], []>} : vector<8x1152xbf16>, vector<1152x256xbf16>, vector<8x256xf32> -> vector<8x256xf32>
    %c0_4 = arith.constant 0 : index
    %c0_5 = arith.constant 0 : index
    %4 = vector.load %arg3[%c0_4, %c0_5] : memref<8x1xf32, #tpu.memory_space<vmem>>, vector<8x1xf32>
    %5 = vector.broadcast %4 : vector<8x1xf32> to vector<8x256xf32>
    %6 = arith.mulf %3, %5 : vector<8x256xf32>
    %cst_6 = arith.constant dense<0.000000e+00> : vector<256xf32>
    %7 = vector.multi_reduction <add>, %6, %cst_6 [0] : vector<8x256xf32> to vector<256xf32>
    %8 = vector.shape_cast %7 : vector<256xf32> to vector<1x256xf32>
    %9 = arith.mulf %6, %3 : vector<8x256xf32>
    %cst_7 = arith.constant dense<0.000000e+00> : vector<256xf32>
    %10 = vector.multi_reduction <add>, %9, %cst_7 [0] : vector<8x256xf32> to vector<256xf32>
    %11 = vector.shape_cast %10 : vector<256xf32> to vector<1x256xf32>
    %12 = arith.mulf %8, %8 : vector<1x256xf32>
    %13 = arith.subf %11, %12 : vector<1x256xf32>
    %cst_8 = arith.constant 0.000000e+00 : f32
    %14 = vector.broadcast %cst_8 : f32 to vector<1x256xf32>
    %15 = arith.maximumf %13, %14 : vector<1x256xf32>
    %16 = vector.broadcast %8 : vector<1x256xf32> to vector<8x256xf32>
    %17 = arith.subf %3, %16 : vector<8x256xf32>
    %cst_9 = arith.constant 9.99999974E-6 : f32
    %18 = vector.broadcast %cst_9 : f32 to vector<1x256xf32>
    %19 = arith.addf %15, %18 : vector<1x256xf32>
    %20 = math.rsqrt %19 : vector<1x256xf32>
    %21 = vector.broadcast %20 : vector<1x256xf32> to vector<8x256xf32>
    %22 = arith.mulf %17, %21 : vector<8x256xf32>
    %cst_10 = arith.constant 0.000000e+00 : f32
    %23 = vector.broadcast %cst_10 : f32 to vector<8x256xf32>
    %24 = arith.cmpf oge, %22, %23 : vector<8x256xf32>
    %cst_11 = arith.constant 2.000000e-01 : f32
    %25 = vector.broadcast %cst_11 : f32 to vector<8x256xf32>
    %26 = arith.mulf %25, %22 : vector<8x256xf32>
    %27 = arith.select %24, %22, %26 : vector<8x256xi1>, vector<8x256xf32>
    %28 = arith.truncf %27 : vector<8x256xf32> to vector<8x256xbf16>
    %c0_12 = arith.constant 0 : index
    %c0_13 = arith.constant 0 : index
    %29 = vector.load %arg4[%c0_12, %c0_13] : memref<256x128xbf16, #tpu.memory_space<vmem>>, vector<256x128xbf16>
    %cst_14 = arith.constant dense<0.000000e+00> : vector<8x128xf32>
    %30 = tpu.matmul %28, %29, %cst_14 {dimension_numbers = #tpu.dot_dimension_numbers<[1], [0], [0], [1], [0, 0, 1, 1], [], []>} : vector<8x256xbf16>, vector<256x128xbf16>, vector<8x128xf32> -> vector<8x128xf32>
    %c0_15 = arith.constant 0 : index
    %c0_16 = arith.constant 0 : index
    %31 = vector.load %arg5[%c0_15, %c0_16] : memref<1x128xf32, #tpu.memory_space<vmem>>, vector<1x128xf32>
    %32 = vector.broadcast %31 : vector<1x128xf32> to vector<8x128xf32>
    %33 = arith.addf %30, %32 : vector<8x128xf32>
    %c0_17 = arith.constant 0 : index
    %c0_18 = arith.constant 0 : index
    %c0_19 = arith.constant 0 : index
    %34 = vector.load %arg6[%c0_17, %c0_18, %c0_19] : memref<1x8x128xf32, #tpu.memory_space<vmem>>, vector<1x8x128xf32>
    %35 = vector.shape_cast %34 : vector<1x8x128xf32> to vector<8x128xf32>
    %36 = vector.shape_cast %33 : vector<8x128xf32> to vector<1x8x128xf32>
    tpu.vector_store %arg6[%c0_17, %c0_18, %c0_19], %36 {strides = array<i32>} : memref<1x8x128xf32, #tpu.memory_space<vmem>>, vector<1x8x128xf32>,
    return
  }
  func.func @transform_0(%arg0: i32) -> (i32, i32, i32) {
    %c0_i32 = arith.constant 0 : i32
    %c0_i32_0 = arith.constant 0 : i32
    %c0_i32_1 = arith.constant 0 : i32
    return %arg0, %c0_i32, %c0_i32_0 : i32, i32, i32
  }
  func.func @transform_1(%arg0: i32) -> (i32, i32) {
    %c0_i32 = arith.constant 0 : i32
    %c0_i32_0 = arith.constant 0 : i32
    %c0_i32_1 = arith.constant 0 : i32
    return %c0_i32, %c0_i32_0 : i32, i32
  }
  func.func @transform_2(%arg0: i32) -> (i32, i32) {
    %c0_i32 = arith.constant 0 : i32
    %c0_i32_0 = arith.constant 0 : i32
    %c0_i32_1 = arith.constant 0 : i32
    return %c0_i32, %c0_i32_0 : i32, i32
  }
  func.func @transform_3(%arg0: i32) -> (i32, i32) {
    %c0_i32 = arith.constant 0 : i32
    %c0_i32_0 = arith.constant 0 : i32
    %c0_i32_1 = arith.constant 0 : i32
    return %c0_i32, %c0_i32_0 : i32, i32
  }
  func.func @transform_4(%arg0: i32) -> (i32, i32) {
    %c0_i32 = arith.constant 0 : i32
    %c0_i32_0 = arith.constant 0 : i32
    %c0_i32_1 = arith.constant 0 : i32
    return %c0_i32, %c0_i32_0 : i32, i32
  }
  func.func @transform_5(%arg0: i32) -> (i32, i32, i32) {
    %c0_i32 = arith.constant 0 : i32
    %c0_i32_0 = arith.constant 0 : i32
    %c0_i32_1 = arith.constant 0 : i32
    return %arg0, %c0_i32, %c0_i32_0 : i32, i32, i32
  }
}

</mosaic_0001>

<llo_original>
// kernel: discriminator_forward.3
$region0: #{discriminator_forward.3}
  #allocation0 [shape = 'u32[]', space=smem, size = 0x4, offset = 0x4, fixed_abs, tag = 'smem constant byte address 0x4 - core index']
  #allocation1 [shape = 'u32[144,128]{1,0:T(1,128)}', space=vmem, size = 0x12000, scoped, tag = 'internal scratch']
  %s0 = inlined_call_operand.vmem [shape: bf16[2,64,27], index: 0, kind: input, shape index: {}]
  %s1 = inlined_call_operand.vmem [shape: bf16[27,128], index: 1, kind: input, shape index: {}]
  %s2 = inlined_call_operand.vmem [shape: f32[1,128], index: 2, kind: input, shape index: {}]
  %s3 = inlined_call_operand.vmem [shape: bf16[2,64,128], index: 3, kind: output, shape index: {}]
  %s4 = sld [smem:[#allocation0]]
  $region45: #{discriminator_forward.3} parent=0
    _
  %s6 = ssub.s32 1, %s4
  %s7 = scalar_select 0, %s6, %s4
  loop: start=0, step=1, limit=4
  $region2: #{discriminator_forward.3} parent=0 // loop_pre_header
    _
  $region3: #{discriminator_forward.3} parent=0 // loop_header
    %s9 = sphi 0, %s13
    %p10 = scmp.ge.s32.totalorder %s9, 4
    %s16 = sphi 0, %s28
    %s17 = sphi 0, %s24
    %s18 = sphi 0, %s16
    %s19 = sphi 0, %s17
    %s20 = sphi 0, %s18
    %s21 = sphi 0, %s19
    %s33 = sphi 0, %s35
    %s36 = sphi 0, %s33
    %s37 = sphi 0, %s36
    %s53 = sphi 0, %s37
    %s57 = sphi 0, %s57
    %s59 = sphi 0, %s57
    %s60 = sphi 0, %s59
    %s74 = sphi 0, %s60
    %s78 = sphi 0, %s78
    %s80 = sphi 0, %s78
    %s81 = sphi 0, %s80
    %s95 = sphi 0, %s81
    %s103 = sphi 0, %s105
    %s106 = sphi 0, %s103
    %s107 = sphi 0, %s106
    %s123 = sphi 0, %s107
  $region4: #{discriminator_forward.3} parent=0 // loop_header_branch
    %12 = sbr.rel (%p10) target = $region8
  $region5: #{discriminator_forward.3} parent=0 // loop_body
    %s14 = ssub.s32 %s9, 1
    %s15 = ssub.s32 %s9, 2
    %s22 = sadd.s32 1, %s17
    %p23 = scmp.ge.s32.totalorder %s22, 1
    %s24 = scalar_select %p23, 0, %s22
    %s25 = sadd.s32 1, %s16
    %s26 = scalar_select %p23, %s25, %s16
    %p27 = scmp.ge.s32.totalorder %s26, 2
    %s28 = scalar_select %p27, 0, %s26
    %s29 = ssub.s32 %s16, %s28
    %s30 = ssub.s32 %s17, %s24
    %s31 = sor.u32 %s29, %s30
    %p32 = scmp.eq.s32.totalorder %s31, 0
    %s34 = sadd.s32 %s33, 1
    %s35 = scalar_select %p32, %s33, %s34
    %p38 = pneg %p32
    %p39 = scmp.eq.s32.totalorder %s9, 1
    %p40 = por %p38, %p39
    %p41 = scmp.ne.s32.totalorder %s33, %s36
    %p42 = scmp.eq.s32.totalorder %s9, 0
    %p43 = por %p41, %p42
    %p44 = scmp.ne.s32.totalorder %s33, %s36
    %p45 = scmp.eq.s32.totalorder %s14, 1
    %p46 = por %p44, %p45
    %p47 = scmp.ne.s32.totalorder %s36, %s37
    %p48 = scmp.eq.s32.totalorder %s14, 0
    %p49 = por %p47, %p48
    %p50 = scmp.ne.s32.totalorder %s36, %s37
    %p51 = scmp.eq.s32.totalorder %s15, 1
    %p52 = por %p50, %p51
    %p54 = scmp.ne.s32.totalorder %s37, %s53
    %p55 = scmp.eq.s32.totalorder %s15, 0
    %p56 = por %p54, %p55
    %s58 = sadd.s32 %s57, 1
    %p61 = scmp.eq.s32.totalorder %s9, 1
    %p62 = scmp.ne.s32.totalorder %s57, %s59
    %p63 = scmp.eq.s32.totalorder %s9, 0
    %p64 = por %p62, %p63
    %p65 = scmp.ne.s32.totalorder %s57, %s59
    %p66 = scmp.eq.s32.totalorder %s14, 1
    %p67 = por %p65, %p66
    %p68 = scmp.ne.s32.totalorder %s59, %s60
    %p69 = scmp.eq.s32.totalorder %s14, 0
    %p70 = por %p68, %p69
    %p71 = scmp.ne.s32.totalorder %s59, %s60
    %p72 = scmp.eq.s32.totalorder %s15, 1
    %p73 = por %p71, %p72
    %p75 = scmp.ne.s32.totalorder %s60, %s74
    %p76 = scmp.eq.s32.totalorder %s15, 0
    %p77 = por %p75, %p76
    %s79 = sadd.s32 %s78, 1
    %p82 = scmp.eq.s32.totalorder %s9, 1
    %p83 = scmp.ne.s32.totalorder %s78, %s80
    %p84 = scmp.eq.s32.totalorder %s9, 0
    %p85 = por %p83, %p84
    %p86 = scmp.ne.s32.totalorder %s78, %s80
    %p87 = scmp.eq.s32.totalorder %s14, 1
    %p88 = por %p86, %p87
    %p89 = scmp.ne.s32.totalorder %s80, %s81
    %p90 = scmp.eq.s32.totalorder %s14, 0
    %p91 = por %p89, %p90
    %p92 = scmp.ne.s32.totalorder %s80, %s81
    %p93 = scmp.eq.s32.totalorder %s15, 1
    %p94 = por %p92, %p93
    %p96 = scmp.ne.s32.totalorder %s81, %s95
    %p97 = scmp.eq.s32.totalorder %s15, 0
    %p98 = por %p96, %p97
    %s99 = ssub.s32 %s16, %s28
    %s100 = ssub.s32 %s17, %s24
    %s101 = sor.u32 %s99, %s100
    %p102 = scmp.eq.s32.totalorder %s101, 0
    %s104 = sadd.s32 %s103, 1
    %s105 = scalar_select %p102, %s103, %s104
    %p108 = pneg %p102
    %p109 = scmp.eq.s32.totalorder %s9, 1
    %p110 = por %p108, %p109
    %p111 = scmp.ne.s32.totalorder %s103, %s106
    %p112 = scmp.eq.s32.totalorder %s9, 0
    %p113 = por %p111, %p112
    %p114 = scmp.ne.s32.totalorder %s103, %s106
    %p115 = scmp.eq.s32.totalorder %s14, 1
    %p116 = por %p114, %p115
    %p117 = scmp.ne.s32.totalorder %s106, %s107
    %p118 = scmp.eq.s32.totalorder %s14, 0
    %p119 = por %p117, %p118
    %p120 = scmp.ne.s32.totalorder %s106, %s107
    %p121 = scmp.eq.s32.totalorder %s15, 1
    %p122 = por %p120, %p121
    %p124 = scmp.ne.s32.totalorder %s107, %s123
    %p125 = scmp.eq.s32.totalorder %s15, 0
    %p126 = por %p124, %p125
    %p127 = scmp.le.s32.totalorder 1, %s9
    %p128 = scmp.lt.s32.totalorder %s9, 3
    %p129 = pnand %p127, %p128
    %p130 = pneg %p129
    // Predicated region
    $region9: #{discriminator_forward.3} parent=5 // pred_check
      _
    $region10: #{discriminator_forward.3} parent=5 // pred_check_branch
      %132 = sbr.rel (%p129) target = $region12
    $region11: #{discriminator_forward.3} parent=5 // pred_region
      %s133 = ssub.s32 %s9, 1
      // Predicated region
      $region13: #{discriminator_forward.3} parent=11 // pred_check
        %p134 = pneg %p70
      $region14: #{discriminator_forward.3} parent=11 // pred_check_branch
        %136 = sbr.rel (%p134) target = $region16
      $region15: #{discriminator_forward.3} parent=11 // pred_region
        _
      $region16: #{discriminator_forward.3} parent=11 // pred_fallthru
        _
      // Predicated region
      $region17: #{discriminator_forward.3} parent=11 // pred_check
        %p137 = pneg %p91
      $region18: #{discriminator_forward.3} parent=11 // pred_check_branch
        %139 = sbr.rel (%p137) target = $region20
      $region19: #{discriminator_forward.3} parent=11 // pred_region
        _
      $region20: #{discriminator_forward.3} parent=11 // pred_fallthru
        _
    $region12: #{discriminator_forward.3} parent=5 // pred_fallthru
      _
    %p140 = scmp.lt.s32.totalorder %s9, 2
    // Predicated region
    $region21: #{discriminator_forward.3} parent=5 // pred_check
      %p141 = pneg %p140
    $region22: #{discriminator_forward.3} parent=5 // pred_check_branch
      %143 = sbr.rel (%p141) target = $region24
    $region23: #{discriminator_forward.3} parent=5 // pred_region
      // Predicated region
      $region25: #{discriminator_forward.3} parent=23 // pred_check
        %p144 = pneg %p43
      $region26: #{discriminator_forward.3} parent=23 // pred_check_branch
        %146 = sbr.rel (%p144) target = $region28
      $region27: #{discriminator_forward.3} parent=23 // pred_region
        %s147 = smul.u32 8, %s17
        %p148 = scmp.lt.s32.totalorder %s16, 1
        %s149 = scalar_select %p148, %s16, 1
        %p150 = scmp.lt.s32.totalorder %s147, 7
        %s151 = scalar_select %p150, %s147, 7
        %s152 = smul.addr %s149, 8
        %s153 = sadd.s32 %s151, %s152
        %s154 = smul.addr %s153, 4
        %s155 = scalar_lea.vmem %s0, %s154
        %s156 = smul.u32 8, %s17
      $region28: #{discriminator_forward.3} parent=23 // pred_fallthru
        _
    $region24: #{discriminator_forward.3} parent=5 // pred_fallthru
      _
    %p157 = scmp.le.s32.totalorder 1, %s9
    %p158 = scmp.lt.s32.totalorder %s9, 3
    %p159 = pnand %p157, %p158
    %p160 = pneg %p159
    // Predicated region
    $region29: #{discriminator_forward.3} parent=5 // pred_check
      _
    $region30: #{discriminator_forward.3} parent=5 // pred_check_branch
      %162 = sbr.rel (%p159) target = $region32
    $region31: #{discriminator_forward.3} parent=5 // pred_region
      %s163 = ssub.s32 %s9, 1
      %s164 = smul.u32 8, %s19
      %p165 = scmp.lt.s32.totalorder %s18, 1
      %s166 = scalar_select %p165, %s18, 1
      %p167 = scmp.lt.s32.totalorder %s164, 7
      %s168 = scalar_select %p167, %s164, 7
      %s169 = smul.addr %s166, 8
      %s170 = sadd.s32 %s168, %s169
      %s171 = smul.addr %s170, 4
      %s172 = scalar_lea.vmem %s0, %s171
      %p173 = pneg %p49
      %p174 = pneg %p46
      %p175 = pneg %p70
      %p176 = pneg %p67
      %p177 = pneg %p91
      %p178 = pneg %p88
      %p179 = pneg %p119
      %p180 = pneg %p116
      %s181 = smul.u32 8, %s19
      %p182 = scmp.lt.s32.totalorder %s18, 1
      %s183 = scalar_select %p182, %s18, 1
      %p184 = scmp.lt.s32.totalorder %s181, 7
      %s185 = scalar_select %p184, %s181, 7
      %s186 = smul.addr %s183, 8
      %s187 = sadd.s32 %s185, %s186
      %s188 = smul.addr %s187, 4
      %s189 = scalar_lea.vmem %s3, %s188
      %s190 = smul.u32 8, %s19
      %p191 = scmp.lt.s32.totalorder %s18, 1
      %s192 = scalar_select %p191, %s18, 1
      %p193 = scmp.lt.s32.totalorder %s190, 7
      %s194 = scalar_select %p193, %s190, 7
      %s195 = smul.addr %s192, 8
      %s196 = sadd.s32 %s194, %s195
      %s197 = smul.addr %s196, 4
      %s198 = scalar_lea.vmem %s0, %s197
      %s199 = smul.u32 8, %s19
      %s200 = smul.u32 8, %s19
      %p201 = scmp.lt.s32.totalorder %s18, 1
      %s202 = scalar_select %p201, %s18, 1
      %p203 = scmp.lt.s32.totalorder %s200, 7
      %s204 = scalar_select %p203, %s200, 7
      %s205 = smul.addr %s202, 8
      %s206 = sadd.s32 %s204, %s205
      %s207 = smul.addr %s206, 4
      %s208 = scalar_lea.vmem %s3, %s207
      %s209 = smul.u32 8, %s19
      %v211 = vld [vmem:[%s198] sm:$0xf]
      %v212 = vld [vmem:[%s198 + $0x4] sm:$0xf]
      %v213 = vld [vmem:[%s198 + $0x8] sm:$0xf]
      %v214 = vld [vmem:[%s198 + $0xc] sm:$0xf]
      %v215 = vld [vmem:[%s198 + $0x10] sm:$0xf]
      %v216 = vld [vmem:[%s198 + $0x14] sm:$0xf]
      %v217 = vld [vmem:[%s198 + $0x18] sm:$0xf]
      %v218 = vld [vmem:[%s198 + $0x1c] sm:$0xf]
      %v219 = vld [vmem:[%s1] sm:$0xf]
      %v220 = vld [vmem:[%s1 + $0x4] sm:$0xf]
      %v221 = vld [vmem:[%s1 + $0x8] sm:$0xf]
      %v222 = vld [vmem:[%s1 + $0xc] sm:$0x3]
      %v223 = vld [vmem:[%s2] sm:$0x1]
      %v225 = vlaneseq
      %v226 = vshrl.u32 %v225, 7
      %v227 = vsub.s32 0, %v226
      %v228 = vrot.slane %v223, %v227
      %v238 = vunpack.c.l.b16 %v211
      %v239 = vunpack.c.l.b16 %v212
      %v240 = vunpack.c.l.b16 %v213
      %v241 = vunpack.c.l.b16 %v214
      %v242 = vunpack.c.l.b16 %v215
      %v243 = vunpack.c.l.b16 %v216
      %v244 = vunpack.c.l.b16 %v217
      %v245 = vunpack.c.l.b16 %v218
      %v246 = vpack.c.b16 %v239, %v238
      %v247 = vpack.c.b16 %v241, %v240
      %v248 = vpack.c.b16 %v243, %v242
      %v249 = vpack.c.b16 %v245, %v244
      %v254 = vunpack.c.l.b16 %v219
      %v255 = vunpack.c.l.b16 %v220
      %v256 = vunpack.c.l.b16 %v221
      %v257 = vunpack.c.l.b16 %v222
      %v258 = vpack.c.b16 %v255, %v254
      %v259 = vpack.c.b16 %v257, %v256
      %vm261 = vcmask 220160
      %v263 = vsel %vm261, %v246, 0
      %v266 = vsel %vm261, %v247, 0
      %v269 = vsel %vm261, %v248, 0
      %v272 = vsel %vm261, %v249, 0
      %vm274 = vcmask 1044480
      %vm275 = vcmask 1045504
      %v276 = vsel %vm274, 4294967295, 65535
      %v277 = vsel %vm275, %v276, 0
      %v279 = vand.u32 %v259, %v277
      %281 = vmatprep.subr.bf16.mxu0 0
      %282 = vmatpush1.bf16.msra.mxu0 %v258
      %283 = vmatprep.subr.bf16.mxu0 0
      %284 = vmatpush1.bf16.msra.mxu0 %v279
      %285 = vmatprep.subr.bf16.mxu0 0
      %286 = vmatpush1.bf16.msra.mxu0 0
      %287 = vmatprep.subr.bf16.mxu0 0
      %288 = vmatpush1.bf16.msra.mxu0 0
      %289 = vmatprep.subr.bf16.mxu0 0
      %290 = vmatpush1.bf16.msra.mxu0 0
      %291 = vmatprep.subr.bf16.mxu0 0
      %292 = vmatpush1.bf16.msra.mxu0 0
      %293 = vmatprep.subr.bf16.mxu0 0
      %294 = vmatpush1.bf16.msra.mxu0 0
      %295 = vmatprep.subr.bf16.mxu0 0
      %296 = vmatpush1.bf16.msra.mxu0 0
      %297 = vmatprep.subr.bf16.mxu0 0
      %298 = vmatpush1.bf16.msra.mxu0 0
      %299 = vmatprep.subr.bf16.mxu0 0
      %300 = vmatpush1.bf16.msra.mxu0 0
      %301 = vmatprep.subr.bf16.mxu0 0
      %302 = vmatpush1.bf16.msra.mxu0 0
      %303 = vmatprep.subr.bf16.mxu0 0
      %304 = vmatpush1.bf16.msra.mxu0 0
      %305 = vmatprep.subr.bf16.mxu0 0
      %306 = vmatpush1.bf16.msra.mxu0 0
      %307 = vmatprep.subr.bf16.mxu0 0
      %308 = vmatpush1.bf16.msra.mxu0 0
      %309 = vmatprep.subr.bf16.mxu0 0
      %310 = vmatpush1.bf16.msra.mxu0 0
      %311 = vmatprep.subr.bf16.mxu0 0
      %312 = vmatpush1.bf16.msra.mxu0 0
      %313 = vmatprep.mubr.bf16.mxu0 0
      %314 = vmatmul.mubr.bf16.gmra.mrb[0].mxu0 %v263
      %v315 = vpop.f32.mrb[0].mxu0
      %v316 = vadd.f32 %v228, %v315
      %v317 = vpop.f32.mrb[0].mxu0
      %v318 = vpop.f32.mrb[0].mxu0
      %v319 = vadd.f32 %v228, %v318
      %v320 = vpop.f32.mrb[0].mxu0
      %321 = vmatprep.mubr.bf16.mxu0 0
      %322 = vmatmul.mubr.bf16.gmra.mrb[0].mxu0 %v266
      %v323 = vpop.f32.mrb[0].mxu0
      %v324 = vadd.f32 %v228, %v323
      %v325 = vpop.f32.mrb[0].mxu0
      %v326 = vpop.f32.mrb[0].mxu0
      %v327 = vadd.f32 %v228, %v326
      %v328 = vpop.f32.mrb[0].mxu0
      %329 = vmatprep.mubr.bf16.mxu0 0
      %330 = vmatmul.mubr.bf16.gmra.mrb[0].mxu0 %v269
      %v331 = vpop.f32.mrb[0].mxu0
      %v332 = vadd.f32 %v228, %v331
      %v333 = vpop.f32.mrb[0].mxu0
      %v334 = vpop.f32.mrb[0].mxu0
      %v335 = vadd.f32 %v228, %v334
      %v336 = vpop.f32.mrb[0].mxu0
      %337 = vmatprep.mubr.bf16.mxu0 0
      %338 = vmatmul.mubr.bf16.gmra.mrb[0].mxu0 %v272
      %v339 = vpop.f32.mrb[0].mxu0
      %v340 = vadd.f32 %v228, %v339
      %v341 = vpop.f32.mrb[0].mxu0
      %v342 = vpop.f32.mrb[0].mxu0
      %v343 = vadd.f32 %v228, %v342
      %v344 = vpop.f32.mrb[0].mxu0
      %345 = vdwg.mxu0
      %vm346 = vcmp.ge.f32.partialorder %v316, 0.0
      %vm347 = vcmp.ge.f32.partialorder %v319, 0.0
      %vm348 = vcmp.ge.f32.partialorder %v324, 0.0
      %vm349 = vcmp.ge.f32.partialorder %v327, 0.0
      %vm350 = vcmp.ge.f32.partialorder %v332, 0.0
      %vm351 = vcmp.ge.f32.partialorder %v335, 0.0
      %vm352 = vcmp.ge.f32.partialorder %v340, 0.0
      %vm353 = vcmp.ge.f32.partialorder %v343, 0.0
      %v354 = vmul.f32 %v316, 0.2
      %v355 = vmul.f32 %v319, 0.2
      %v356 = vmul.f32 %v324, 0.2
      %v357 = vmul.f32 %v327, 0.2
      %v358 = vmul.f32 %v332, 0.2
      %v359 = vmul.f32 %v335, 0.2
      %v360 = vmul.f32 %v340, 0.2
      %v361 = vmul.f32 %v343, 0.2
      %v362 = vsel %vm346, %v316, %v354
      %v363 = vsel %vm347, %v319, %v355
      %v364 = vsel %vm348, %v324, %v356
      %v365 = vsel %vm349, %v327, %v357
      %v366 = vsel %vm350, %v332, %v358
      %v367 = vsel %vm351, %v335, %v359
      %v368 = vsel %vm352, %v340, %v360
      %v369 = vsel %vm353, %v343, %v361
      %v370 = vpack.c.bf16 %v363, %v362
      %v371 = vpack.c.bf16 %v365, %v364
      %v372 = vpack.c.bf16 %v367, %v366
      %v373 = vpack.c.bf16 %v369, %v368
      %v378 = vunpack.c.l.b16 %v370
      %v379 = vunpack.c.h.b16 %v370
      %v380 = vunpack.c.l.b16 %v371
      %v381 = vunpack.c.h.b16 %v371
      %v382 = vunpack.c.l.b16 %v372
      %v383 = vunpack.c.h.b16 %v372
      %v384 = vunpack.c.l.b16 %v373
      %v385 = vunpack.c.h.b16 %v373
      %v386 = vpack.c.b16 %v378, %v378
      %v387 = vpack.c.b16 %v379, %v379
      %v388 = vpack.c.b16 %v380, %v380
      %v389 = vpack.c.b16 %v381, %v381
      %v390 = vpack.c.b16 %v382, %v382
      %v391 = vpack.c.b16 %v383, %v383
      %v392 = vpack.c.b16 %v384, %v384
      %v393 = vpack.c.b16 %v385, %v385
      %402 = vst [vmem:[%s208] sm:$0xf] %v386
      %403 = vst [vmem:[%s208 + $0x4] sm:$0xf] %v387
      %404 = vst [vmem:[%s208 + $0x8] sm:$0xf] %v388
      %405 = vst [vmem:[%s208 + $0xc] sm:$0xf] %v389
      %406 = vst [vmem:[%s208 + $0x10] sm:$0xf] %v390
      %407 = vst [vmem:[%s208 + $0x14] sm:$0xf] %v391
      %408 = vst [vmem:[%s208 + $0x18] sm:$0xf] %v392
      %409 = vst [vmem:[%s208 + $0x1c] sm:$0xf] %v393
      %s410 = smul.u32 8, %s19
      %p411 = scmp.lt.s32.totalorder %s18, 1
      %s412 = scalar_select %p411, %s18, 1
      %p413 = scmp.lt.s32.totalorder %s410, 7
      %s414 = scalar_select %p413, %s410, 7
      %s415 = smul.addr %s412, 8
      %s416 = sadd.s32 %s414, %s415
      %s417 = smul.addr %s416, 4
      %s418 = scalar_lea.vmem %s3, %s417
      // Predicated region
      $region33: #{discriminator_forward.3} parent=31 // pred_check
        %p419 = pneg %p116
      $region34: #{discriminator_forward.3} parent=31 // pred_check_branch
        %421 = sbr.rel (%p419) target = $region36
      $region35: #{discriminator_forward.3} parent=31 // pred_region
        %s422 = smul.u32 8, %s19
      $region36: #{discriminator_forward.3} parent=31 // pred_fallthru
        _
    $region32: #{discriminator_forward.3} parent=5 // pred_fallthru
      _
    %p423 = scmp.le.s32.totalorder 2, %s9
    // Predicated region
    $region37: #{discriminator_forward.3} parent=5 // pred_check
      %p424 = pneg %p423
    $region38: #{discriminator_forward.3} parent=5 // pred_check_branch
      %426 = sbr.rel (%p424) target = $region40
    $region39: #{discriminator_forward.3} parent=5 // pred_region
      %s427 = ssub.s32 %s9, 2
      // Predicated region
      $region41: #{discriminator_forward.3} parent=39 // pred_check
        %p428 = pneg %p122
      $region42: #{discriminator_forward.3} parent=39 // pred_check_branch
        %430 = sbr.rel (%p428) target = $region44
      $region43: #{discriminator_forward.3} parent=39 // pred_region
        %s431 = smul.u32 8, %s21
        %p432 = scmp.lt.s32.totalorder %s20, 1
        %s433 = scalar_select %p432, %s20, 1
        %p434 = scmp.lt.s32.totalorder %s431, 7
        %s435 = scalar_select %p434, %s431, 7
        %s436 = smul.addr %s433, 8
        %s437 = sadd.s32 %s435, %s436
        %s438 = smul.addr %s437, 4
        %s439 = scalar_lea.vmem %s3, %s438
      $region44: #{discriminator_forward.3} parent=39 // pred_fallthru
        _
    $region40: #{discriminator_forward.3} parent=5 // pred_fallthru
      _
  $region6: #{discriminator_forward.3} parent=0 // loop_footer
    %s13 = sadd.s32 1, %s9
  $region7: #{discriminator_forward.3} parent=0 // loop_footer_branch
    %8 = sbr.rel target = $region3
  $region8: #{discriminator_forward.3} parent=0 // loop_exit
    _

// kernel: discriminator_forward.4
$region0: #{discriminator_forward.4}
  #allocation0 [shape = 'u32[]', space=smem, size = 0x4, offset = 0x4, fixed_abs, tag = 'smem constant byte address 0x4 - core index']
  #allocation1 [shape = 'u32[144,128]{1,0:T(1,128)}', space=vmem, size = 0x12000, scoped, tag = 'internal scratch']
  %s0 = inlined_call_operand.vmem [shape: bf16[2,16,576], index: 0, kind: input, shape index: {}]
  %s1 = inlined_call_operand.vmem [shape: bf16[576,128], index: 1, kind: input, shape index: {}]
  %s2 = inlined_call_operand.vmem [shape: f32[16,1], index: 2, kind: input, shape index: {}]
  %s3 = inlined_call_operand.vmem [shape: bf16[2,16,128], index: 3, kind: output, shape index: {}]
  %s4 = sld [smem:[#allocation0]]
  $region45: #{discriminator_forward.4} parent=0
    _
  %s6 = ssub.s32 1, %s4
  %s7 = scalar_select 0, %s6, %s4
  loop: start=0, step=1, limit=4
  $region2: #{discriminator_forward.4} parent=0 // loop_pre_header
    _
  $region3: #{discriminator_forward.4} parent=0 // loop_header
    %s9 = sphi 0, %s13
    %p10 = scmp.ge.s32.totalorder %s9, 4
    %s19 = sphi 0, %s21
    %s22 = sphi 0, %s19
    %s23 = sphi 0, %s22
    %s39 = sphi 0, %s23
    %s43 = sphi 0, %s43
    %s45 = sphi 0, %s43
    %s46 = sphi 0, %s45
    %s60 = sphi 0, %s46
    %s64 = sphi 0, %s64
    %s66 = sphi 0, %s64
    %s67 = sphi 0, %s66
    %s81 = sphi 0, %s67
    %s87 = sphi 0, %s89
    %s90 = sphi 0, %s87
    %s91 = sphi 0, %s90
    %s107 = sphi 0, %s91
  $region4: #{discriminator_forward.4} parent=0 // loop_header_branch
    %12 = sbr.rel (%p10) target = $region8
  $region5: #{discriminator_forward.4} parent=0 // loop_body
    %s14 = ssub.s32 %s9, 1
    %s15 = ssub.s32 %s9, 2
    %s16 = sadd.s32 %s9, 1
    %s17 = ssub.s32 %s9, %s16
    %p18 = scmp.eq.s32.totalorder %s17, 0
    %s20 = sadd.s32 %s19, 1
    %s21 = scalar_select %p18, %s19, %s20
    %p24 = pneg %p18
    %p25 = scmp.eq.s32.totalorder %s9, 1
    %p26 = por %p24, %p25
    %p27 = scmp.ne.s32.totalorder %s19, %s22
    %p28 = scmp.eq.s32.totalorder %s9, 0
    %p29 = por %p27, %p28
    %p30 = scmp.ne.s32.totalorder %s19, %s22
    %p31 = scmp.eq.s32.totalorder %s14, 1
    %p32 = por %p30, %p31
    %p33 = scmp.ne.s32.totalorder %s22, %s23
    %p34 = scmp.eq.s32.totalorder %s14, 0
    %p35 = por %p33, %p34
    %p36 = scmp.ne.s32.totalorder %s22, %s23
    %p37 = scmp.eq.s32.totalorder %s15, 1
    %p38 = por %p36, %p37
    %p40 = scmp.ne.s32.totalorder %s23, %s39
    %p41 = scmp.eq.s32.totalorder %s15, 0
    %p42 = por %p40, %p41
    %s44 = sadd.s32 %s43, 1
    %p47 = scmp.eq.s32.totalorder %s9, 1
    %p48 = scmp.ne.s32.totalorder %s43, %s45
    %p49 = scmp.eq.s32.totalorder %s9, 0
    %p50 = por %p48, %p49
    %p51 = scmp.ne.s32.totalorder %s43, %s45
    %p52 = scmp.eq.s32.totalorder %s14, 1
    %p53 = por %p51, %p52
    %p54 = scmp.ne.s32.totalorder %s45, %s46
    %p55 = scmp.eq.s32.totalorder %s14, 0
    %p56 = por %p54, %p55
    %p57 = scmp.ne.s32.totalorder %s45, %s46
    %p58 = scmp.eq.s32.totalorder %s15, 1
    %p59 = por %p57, %p58
    %p61 = scmp.ne.s32.totalorder %s46, %s60
    %p62 = scmp.eq.s32.totalorder %s15, 0
    %p63 = por %p61, %p62
    %s65 = sadd.s32 %s64, 1
    %p68 = scmp.eq.s32.totalorder %s9, 1
    %p69 = scmp.ne.s32.totalorder %s64, %s66
    %p70 = scmp.eq.s32.totalorder %s9, 0
    %p71 = por %p69, %p70
    %p72 = scmp.ne.s32.totalorder %s64, %s66
    %p73 = scmp.eq.s32.totalorder %s14, 1
    %p74 = por %p72, %p73
    %p75 = scmp.ne.s32.totalorder %s66, %s67
    %p76 = scmp.eq.s32.totalorder %s14, 0
    %p77 = por %p75, %p76
    %p78 = scmp.ne.s32.totalorder %s66, %s67
    %p79 = scmp.eq.s32.totalorder %s15, 1
    %p80 = por %p78, %p79
    %p82 = scmp.ne.s32.totalorder %s67, %s81
    %p83 = scmp.eq.s32.totalorder %s15, 0
    %p84 = por %p82, %p83
    %s85 = ssub.s32 %s9, %s16
    %p86 = scmp.eq.s32.totalorder %s85, 0
    %s88 = sadd.s32 %s87, 1
    %s89 = scalar_select %p86, %s87, %s88
    %p92 = pneg %p86
    %p93 = scmp.eq.s32.totalorder %s9, 1
    %p94 = por %p92, %p93
    %p95 = scmp.ne.s32.totalorder %s87, %s90
    %p96 = scmp.eq.s32.totalorder %s9, 0
    %p97 = por %p95, %p96
    %p98 = scmp.ne.s32.totalorder %s87, %s90
    %p99 = scmp.eq.s32.totalorder %s14, 1
    %p100 = por %p98, %p99
    %p101 = scmp.ne.s32.totalorder %s90, %s91
    %p102 = scmp.eq.s32.totalorder %s14, 0
    %p103 = por %p101, %p102
    %p104 = scmp.ne.s32.totalorder %s90, %s91
    %p105 = scmp.eq.s32.totalorder %s15, 1
    %p106 = por %p104, %p105
    %p108 = scmp.ne.s32.totalorder %s91, %s107
    %p109 = scmp.eq.s32.totalorder %s15, 0
    %p110 = por %p108, %p109
    %p111 = scmp.le.s32.totalorder 1, %s9
    %p112 = scmp.lt.s32.totalorder %s9, 3
    %p113 = pnand %p111, %p112
    %p114 = pneg %p113
    // Predicated region
    $region9: #{discriminator_forward.4} parent=5 // pred_check
      _
    $region10: #{discriminator_forward.4} parent=5 // pred_check_branch
      %116 = sbr.rel (%p113) target = $region12
    $region11: #{discriminator_forward.4} parent=5 // pred_region
      %s117 = ssub.s32 %s9, 1
      // Predicated region
      $region13: #{discriminator_forward.4} parent=11 // pred_check
        %p118 = pneg %p56
      $region14: #{discriminator_forward.4} parent=11 // pred_check_branch
        %120 = sbr.rel (%p118) target = $region16
      $region15: #{discriminator_forward.4} parent=11 // pred_region
        _
      $region16: #{discriminator_forward.4} parent=11 // pred_fallthru
        _
      // Predicated region
      $region17: #{discriminator_forward.4} parent=11 // pred_check
        %p121 = pneg %p77
      $region18: #{discriminator_forward.4} parent=11 // pred_check_branch
        %123 = sbr.rel (%p121) target = $region20
      $region19: #{discriminator_forward.4} parent=11 // pred_region
        _
      $region20: #{discriminator_forward.4} parent=11 // pred_fallthru
        _
    $region12: #{discriminator_forward.4} parent=5 // pred_fallthru
      _
    %p124 = scmp.lt.s32.totalorder %s9, 2
    // Predicated region
    $region21: #{discriminator_forward.4} parent=5 // pred_check
      %p125 = pneg %p124
    $region22: #{discriminator_forward.4} parent=5 // pred_check_branch
      %127 = sbr.rel (%p125) target = $region24
    $region23: #{discriminator_forward.4} parent=5 // pred_region
      // Predicated region
      $region25: #{discriminator_forward.4} parent=23 // pred_check
        %p128 = pneg %p29
      $region26: #{discriminator_forward.4} parent=23 // pred_check_branch
        %130 = sbr.rel (%p128) target = $region28
      $region27: #{discriminator_forward.4} parent=23 // pred_region
        %p131 = scmp.lt.s32.totalorder %s9, 1
        %s132 = scalar_select %p131, %s9, 1
        %s133 = smul.addr %s132, 10
        %s134 = smul.addr %s133, 4
        %s135 = scalar_lea.vmem %s0, %s134
      $region28: #{discriminator_forward.4} parent=23 // pred_fallthru
        _
    $region24: #{discriminator_forward.4} parent=5 // pred_fallthru
      _
    %p136 = scmp.le.s32.totalorder 1, %s9
    %p137 = scmp.lt.s32.totalorder %s9, 3
    %p138 = pnand %p136, %p137
    %p139 = pneg %p138
    // Predicated region
    $region29: #{discriminator_forward.4} parent=5 // pred_check
      _
    $region30: #{discriminator_forward.4} parent=5 // pred_check_branch
      %141 = sbr.rel (%p138) target = $region32
    $region31: #{discriminator_forward.4} parent=5 // pred_region
      %s142 = ssub.s32 %s9, 1
      %p143 = scmp.lt.s32.totalorder %s14, 1
      %s144 = scalar_select %p143, %s14, 1
      %s145 = smul.addr %s144, 10
      %s146 = smul.addr %s145, 4
      %s147 = scalar_lea.vmem %s0, %s146
      %p148 = pneg %p35
      %p149 = pneg %p32
      %p150 = pneg %p56
      %p151 = pneg %p53
      %p152 = pneg %p77
      %p153 = pneg %p74
      %p154 = pneg %p103
      %p155 = pneg %p100
      %p156 = scmp.lt.s32.totalorder %s14, 1
      %s157 = scalar_select %p156, %s14, 1
      %s158 = smul.addr %s157, 2
      %s159 = smul.addr %s158, 4
      %s160 = scalar_lea.vmem %s3, %s159
      %p161 = scmp.lt.s32.totalorder %s14, 1
      %s162 = scalar_select %p161, %s14, 1
      %s163 = smul.addr %s162, 10
      %s164 = smul.addr %s163, 4
      %s165 = scalar_lea.vmem %s0, %s164
      %p166 = scmp.lt.s32.totalorder %s14, 1
      %s167 = scalar_select %p166, %s14, 1
      %s168 = smul.addr %s167, 2
      %s169 = smul.addr %s168, 4
      %s170 = scalar_lea.vmem %s3, %s169
      %v172 = vld [vmem:[%s165] sm:$0xff]
      %v173 = vld [vmem:[%s165 + $0x8] sm:$0xff]
      %v174 = vld [vmem:[%s165 + $0x10] sm:$0xf]
      %v175 = vld [vmem:[%s165 + $0x14] sm:$0xff]
      %v176 = vld [vmem:[%s165 + $0x1c] sm:$0xff]
      %v177 = vld [vmem:[%s165 + $0x24] sm:$0xf]
      %v178 = vld [vmem:[%s1] sm:$0xf]
      %v179 = vld [vmem:[%s1 + $0x4] sm:$0xf]
      %v180 = vld [vmem:[%s1 + $0x8] sm:$0xf]
      %v181 = vld [vmem:[%s1 + $0xc] sm:$0xf]
      %v182 = vld [vmem:[%s1 + $0x10] sm:$0xf]
      %v183 = vld [vmem:[%s1 + $0x14] sm:$0xf]
      %v184 = vld [vmem:[%s1 + $0x18] sm:$0xf]
      %v185 = vld [vmem:[%s1 + $0x1c] sm:$0xf]
      %v186 = vld [vmem:[%s1 + $0x20] sm:$0xf]
      %v187 = vld [vmem:[%s1 + $0x24] sm:$0xf]
      %v188 = vld [vmem:[%s1 + $0x28] sm:$0xf]
      %v189 = vld [vmem:[%s1 + $0x2c] sm:$0xf]
      %v190 = vld [vmem:[%s1 + $0x30] sm:$0xf]
      %v191 = vld [vmem:[%s1 + $0x34] sm:$0xf]
      %v192 = vld [vmem:[%s1 + $0x38] sm:$0xf]
      %v193 = vld [vmem:[%s1 + $0x3c] sm:$0xf]
      %v194 = vld [vmem:[%s1 + $0x40] sm:$0xf]
      %v195 = vld [vmem:[%s1 + $0x44] sm:$0xf]
      %v196 = vld [vmem:[%s1 + $0x48] sm:$0xf]
      %v197 = vld [vmem:[%s1 + $0x4c] sm:$0xf]
      %v198 = vld [vmem:[%s1 + $0x50] sm:$0xf]
      %v199 = vld [vmem:[%s1 + $0x54] sm:$0xf]
      %v200 = vld [vmem:[%s1 + $0x58] sm:$0xf]
      %v201 = vld [vmem:[%s1 + $0x5c] sm:$0xf]
      %v202 = vld [vmem:[%s1 + $0x60] sm:$0xf]
      %v203 = vld [vmem:[%s1 + $0x64] sm:$0xf]
      %v204 = vld [vmem:[%s1 + $0x68] sm:$0xf]
      %v205 = vld [vmem:[%s1 + $0x6c] sm:$0xf]
      %v206 = vld [vmem:[%s1 + $0x70] sm:$0xf]
      %v207 = vld [vmem:[%s1 + $0x74] sm:$0xf]
      %v208 = vld [vmem:[%s1 + $0x78] sm:$0xf]
      %v209 = vld [vmem:[%s1 + $0x7c] sm:$0xf]
      %v210 = vld [vmem:[%s1 + $0x80] sm:$0xf]
      %v211 = vld [vmem:[%s1 + $0x84] sm:$0xf]
      %v212 = vld [vmem:[%s1 + $0x88] sm:$0xf]
      %v213 = vld [vmem:[%s1 + $0x8c] sm:$0xf]
      %v214 = vld [vmem:[%s1 + $0x90] sm:$0xf]
      %v215 = vld [vmem:[%s1 + $0x94] sm:$0xf]
      %v216 = vld [vmem:[%s1 + $0x98] sm:$0xf]
      %v217 = vld [vmem:[%s1 + $0x9c] sm:$0xf]
      %v218 = vld [vmem:[%s1 + $0xa0] sm:$0xf]
      %v219 = vld [vmem:[%s1 + $0xa4] sm:$0xf]
      %v220 = vld [vmem:[%s1 + $0xa8] sm:$0xf]
      %v221 = vld [vmem:[%s1 + $0xac] sm:$0xf]
      %v222 = vld [vmem:[%s1 + $0xb0] sm:$0xf]
      %v223 = vld [vmem:[%s1 + $0xb4] sm:$0xf]
      %v224 = vld [vmem:[%s1 + $0xb8] sm:$0xf]
      %v225 = vld [vmem:[%s1 + $0xbc] sm:$0xf]
      %v226 = vld [vmem:[%s1 + $0xc0] sm:$0xf]
      %v227 = vld [vmem:[%s1 + $0xc4] sm:$0xf]
      %v228 = vld [vmem:[%s1 + $0xc8] sm:$0xf]
      %v229 = vld [vmem:[%s1 + $0xcc] sm:$0xf]
      %v230 = vld [vmem:[%s1 + $0xd0] sm:$0xf]
      %v231 = vld [vmem:[%s1 + $0xd4] sm:$0xf]
      %v232 = vld [vmem:[%s1 + $0xd8] sm:$0xf]
      %v233 = vld [vmem:[%s1 + $0xdc] sm:$0xf]
      %v234 = vld [vmem:[%s1 + $0xe0] sm:$0xf]
      %v235 = vld [vmem:[%s1 + $0xe4] sm:$0xf]
      %v236 = vld [vmem:[%s1 + $0xe8] sm:$0xf]
      %v237 = vld [vmem:[%s1 + $0xec] sm:$0xf]
      %v238 = vld [vmem:[%s1 + $0xf0] sm:$0xf]
      %v239 = vld [vmem:[%s1 + $0xf4] sm:$0xf]
      %v240 = vld [vmem:[%s1 + $0xf8] sm:$0xf]
      %v241 = vld [vmem:[%s1 + $0xfc] sm:$0xf]
      %v242 = vld [vmem:[%s1 + $0x100] sm:$0xf]
      %v243 = vld [vmem:[%s1 + $0x104] sm:$0xf]
      %v244 = vld [vmem:[%s1 + $0x108] sm:$0xf]
      %v245 = vld [vmem:[%s1 + $0x10c] sm:$0xf]
      %v246 = vld [vmem:[%s1 + $0x110] sm:$0xf]
      %v247 = vld [vmem:[%s1 + $0x114] sm:$0xf]
      %v248 = vld [vmem:[%s1 + $0x118] sm:$0xf]
      %v249 = vld [vmem:[%s1 + $0x11c] sm:$0xf]
      %v256 = vunpack.c.l.b16 %v172
      %v257 = vunpack.c.h.b16 %v172
      %v258 = vunpack.c.l.b16 %v173
      %v259 = vunpack.c.h.b16 %v173
      %v260 = vunpack.c.l.b16 %v174
      %v261 = vunpack.c.l.b16 %v175
      %v262 = vunpack.c.h.b16 %v175
      %v263 = vunpack.c.l.b16 %v176
      %v264 = vunpack.c.h.b16 %v176
      %v265 = vunpack.c.l.b16 %v177
      %v266 = vpack.c.b16 %v261, %v256
      %v267 = vpack.c.b16 %v262, %v257
      %v268 = vpack.c.b16 %v263, %v258
      %v269 = vpack.c.b16 %v264, %v259
      %v270 = vpack.c.b16 %v265, %v260
      %v347 = vunpack.c.l.b16 %v178
      %v348 = vunpack.c.l.b16 %v179
      %v349 = vunpack.c.l.b16 %v180
      %v350 = vunpack.c.l.b16 %v181
      %v351 = vunpack.c.l.b16 %v182
      %v352 = vunpack.c.l.b16 %v183
      %v353 = vunpack.c.l.b16 %v184
      %v354 = vunpack.c.l.b16 %v185
      %v355 = vunpack.c.l.b16 %v186
      %v356 = vunpack.c.l.b16 %v187
      %v357 = vunpack.c.l.b16 %v188
      %v358 = vunpack.c.l.b16 %v189
      %v359 = vunpack.c.l.b16 %v190
      %v360 = vunpack.c.l.b16 %v191
      %v361 = vunpack.c.l.b16 %v192
      %v362 = vunpack.c.l.b16 %v193
      %v363 = vunpack.c.l.b16 %v194
      %v364 = vunpack.c.l.b16 %v195
      %v365 = vunpack.c.l.b16 %v196
      %v366 = vunpack.c.l.b16 %v197
      %v367 = vunpack.c.l.b16 %v198
      %v368 = vunpack.c.l.b16 %v199
      %v369 = vunpack.c.l.b16 %v200
      %v370 = vunpack.c.l.b16 %v201
      %v371 = vunpack.c.l.b16 %v202
      %v372 = vunpack.c.l.b16 %v203
      %v373 = vunpack.c.l.b16 %v204
      %v374 = vunpack.c.l.b16 %v205
      %v375 = vunpack.c.l.b16 %v206
      %v376 = vunpack.c.l.b16 %v207
      %v377 = vunpack.c.l.b16 %v208
      %v378 = vunpack.c.l.b16 %v209
      %v379 = vunpack.c.l.b16 %v210
      %v380 = vunpack.c.l.b16 %v211
      %v381 = vunpack.c.l.b16 %v212
      %v382 = vunpack.c.l.b16 %v213
      %v383 = vunpack.c.l.b16 %v214
      %v384 = vunpack.c.l.b16 %v215
      %v385 = vunpack.c.l.b16 %v216
      %v386 = vunpack.c.l.b16 %v217
      %v387 = vunpack.c.l.b16 %v218
      %v388 = vunpack.c.l.b16 %v219
      %v389 = vunpack.c.l.b16 %v220
      %v390 = vunpack.c.l.b16 %v221
      %v391 = vunpack.c.l.b16 %v222
      %v392 = vunpack.c.l.b16 %v223
      %v393 = vunpack.c.l.b16 %v224
      %v394 = vunpack.c.l.b16 %v225
      %v395 = vunpack.c.l.b16 %v226
      %v396 = vunpack.c.l.b16 %v227
      %v397 = vunpack.c.l.b16 %v228
      %v398 = vunpack.c.l.b16 %v229
      %v399 = vunpack.c.l.b16 %v230
      %v400 = vunpack.c.l.b16 %v231
      %v401 = vunpack.c.l.b16 %v232
      %v402 = vunpack.c.l.b16 %v233
      %v403 = vunpack.c.l.b16 %v234
      %v404 = vunpack.c.l.b16 %v235
      %v405 = vunpack.c.l.b16 %v236
      %v406 = vunpack.c.l.b16 %v237
      %v407 = vunpack.c.l.b16 %v238
      %v408 = vunpack.c.l.b16 %v239
      %v409 = vunpack.c.l.b16 %v240
      %v410 = vunpack.c.l.b16 %v241
      %v411 = vunpack.c.l.b16 %v242
      %v412 = vunpack.c.l.b16 %v243
      %v413 = vunpack.c.l.b16 %v244
      %v414 = vunpack.c.l.b16 %v245
      %v415 = vunpack.c.l.b16 %v246
      %v416 = vunpack.c.l.b16 %v247
      %v417 = vunpack.c.l.b16 %v248
      %v418 = vunpack.c.l.b16 %v249
      %v419 = vpack.c.b16 %v348, %v347
      %v420 = vpack.c.b16 %v350, %v349
      %v421 = vpack.c.b16 %v352, %v351
      %v422 = vpack.c.b16 %v354, %v353
      %v423 = vpack.c.b16 %v356, %v355
      %v424 = vpack.c.b16 %v358, %v357
      %v425 = vpack.c.b16 %v360, %v359
      %v426 = vpack.c.b16 %v362, %v361
      %v427 = vpack.c.b16 %v364, %v363
      %v428 = vpack.c.b16 %v366, %v365
      %v429 = vpack.c.b16 %v368, %v367
      %v430 = vpack.c.b16 %v370, %v369
      %v431 = vpack.c.b16 %v372, %v371
      %v432 = vpack.c.b16 %v374, %v373
      %v433 = vpack.c.b16 %v376, %v375
      %v434 = vpack.c.b16 %v378, %v377
      %v435 = vpack.c.b16 %v380, %v379
      %v436 = vpack.c.b16 %v382, %v381
      %v437 = vpack.c.b16 %v384, %v383
      %v438 = vpack.c.b16 %v386, %v385
      %v439 = vpack.c.b16 %v388, %v387
      %v440 = vpack.c.b16 %v390, %v389
      %v441 = vpack.c.b16 %v392, %v391
      %v442 = vpack.c.b16 %v394, %v393
      %v443 = vpack.c.b16 %v396, %v395
      %v444 = vpack.c.b16 %v398, %v397
      %v445 = vpack.c.b16 %v400, %v399
      %v446 = vpack.c.b16 %v402, %v401
      %v447 = vpack.c.b16 %v404, %v403
      %v448 = vpack.c.b16 %v406, %v405
      %v449 = vpack.c.b16 %v408, %v407
      %v450 = vpack.c.b16 %v410, %v409
      %v451 = vpack.c.b16 %v412, %v411
      %v452 = vpack.c.b16 %v414, %v413
      %v453 = vpack.c.b16 %v416, %v415
      %v454 = vpack.c.b16 %v418, %v417
      %vm491 = vcmask 523264
      %v493 = vsel %vm491, %v270, 0
      %495 = vmatprep.subr.bf16.mxu0 0
      %496 = vmatpush1.bf16.msra.mxu0 %v419
      %497 = vmatprep.subr.bf16.mxu0 0
      %498 = vmatpush1.bf16.msra.mxu0 %v420
      %499 = vmatprep.subr.bf16.mxu0 0
      %500 = vmatpush1.bf16.msra.mxu0 %v421
      %501 = vmatprep.subr.bf16.mxu0 0
      %502 = vmatpush1.bf16.msra.mxu0 %v422
      %503 = vmatprep.subr.bf16.mxu0 0
      %504 = vmatpush1.bf16.msra.mxu0 %v423
      %505 = vmatprep.subr.bf16.mxu0 0
      %506 = vmatpush1.bf16.msra.mxu0 %v424
      %507 = vmatprep.subr.bf16.mxu0 0
      %508 = vmatpush1.bf16.msra.mxu0 %v425
      %509 = vmatprep.subr.bf16.mxu0 0
      %510 = vmatpush1.bf16.msra.mxu0 %v426
      %511 = vmatprep.subr.bf16.mxu0 0
      %512 = vmatpush1.bf16.msra.mxu0 %v427
      %513 = vmatprep.subr.bf16.mxu0 0
      %514 = vmatpush1.bf16.msra.mxu0 %v428
      %515 = vmatprep.subr.bf16.mxu0 0
      %516 = vmatpush1.bf16.msra.mxu0 %v429
      %517 = vmatprep.subr.bf16.mxu0 0
      %518 = vmatpush1.bf16.msra.mxu0 %v430
      %519 = vmatprep.subr.bf16.mxu0 0
      %520 = vmatpush1.bf16.msra.mxu0 %v431
      %521 = vmatprep.subr.bf16.mxu0 0
      %522 = vmatpush1.bf16.msra.mxu0 %v432
      %523 = vmatprep.subr.bf16.mxu0 0
      %524 = vmatpush1.bf16.msra.mxu0 %v433
      %525 = vmatprep.subr.bf16.mxu0 0
      %526 = vmatpush1.bf16.msra.mxu0 %v434
      %527 = vmatprep.mubr.bf16.mxu0 %v267
      %528 = vmatmul.mubr.bf16.gmra.mrb[0].mxu0 %v266
      %v529 = vpop.f32.mrb[0].mxu0
      %v530 = vadd.f32 0.0, %v529
      %v531 = vpop.f32.mrb[0].mxu0
      %v532 = vpop.f32.mrb[0].mxu0
      %v533 = vadd.f32 0.0, %v532
      %v534 = vpop.f32.mrb[0].mxu0
      %535 = vdwg.mxu0
      %536 = vmatprep.subr.bf16.mxu0 0
      %537 = vmatpush1.bf16.msra.mxu0 %v435
      %538 = vmatprep.subr.bf16.mxu0 0
      %539 = vmatpush1.bf16.msra.mxu0 %v436
      %540 = vmatprep.subr.bf16.mxu0 0
      %541 = vmatpush1.bf16.msra.mxu0 %v437
      %542 = vmatprep.subr.bf16.mxu0 0
      %543 = vmatpush1.bf16.msra.mxu0 %v438
      %544 = vmatprep.subr.bf16.mxu0 0
      %545 = vmatpush1.bf16.msra.mxu0 %v439
      %546 = vmatprep.subr.bf16.mxu0 0
      %547 = vmatpush1.bf16.msra.mxu0 %v440
      %548 = vmatprep.subr.bf16.mxu0 0
      %549 = vmatpush1.bf16.msra.mxu0 %v441
      %550 = vmatprep.subr.bf16.mxu0 0
      %551 = vmatpush1.bf16.msra.mxu0 %v442
      %552 = vmatprep.subr.bf16.mxu0 0
      %553 = vmatpush1.bf16.msra.mxu0 %v443
      %554 = vmatprep.subr.bf16.mxu0 0
      %555 = vmatpush1.bf16.msra.mxu0 %v444
      %556 = vmatprep.subr.bf16.mxu0 0
      %557 = vmatpush1.bf16.msra.mxu0 %v445
      %558 = vmatprep.subr.bf16.mxu0 0
      %559 = vmatpush1.bf16.msra.mxu0 %v446
      %560 = vmatprep.subr.bf16.mxu0 0
      %561 = vmatpush1.bf16.msra.mxu0 %v447
      %562 = vmatprep.subr.bf16.mxu0 0
      %563 = vmatpush1.bf16.msra.mxu0 %v448
      %564 = vmatprep.subr.bf16.mxu0 0
      %565 = vmatpush1.bf16.msra.mxu0 %v449
      %566 = vmatprep.subr.bf16.mxu0 0
      %567 = vmatpush1.bf16.msra.mxu0 %v450
      %568 = vmatprep.mubr.bf16.mxu0 %v269
      %569 = vmatmul.mubr.bf16.gmra.mrb[0].mxu0 %v268
      %v570 = vpop.f32.mrb[0].mxu0
      %v571 = vadd.f32 %v530, %v570
      %v572 = vpop.f32.mrb[0].mxu0
      %v573 = vpop.f32.mrb[0].mxu0
      %v574 = vadd.f32 %v533, %v573
      %v575 = vpop.f32.mrb[0].mxu0
      %576 = vdwg.mxu0
      %577 = vmatprep.subr.bf16.mxu0 0
      %578 = vmatpush1.bf16.msra.mxu0 %v451
      %579 = vmatprep.subr.bf16.mxu0 0
      %580 = vmatpush1.bf16.msra.mxu0 %v452
      %581 = vmatprep.subr.bf16.mxu0 0
      %582 = vmatpush1.bf16.msra.mxu0 %v453
      %583 = vmatprep.subr.bf16.mxu0 0
      %584 = vmatpush1.bf16.msra.mxu0 %v454
      %585 = vmatprep.subr.bf16.mxu0 0
      %586 = vmatpush1.bf16.msra.mxu0 0
      %587 = vmatprep.subr.bf16.mxu0 0
      %588 = vmatpush1.bf16.msra.mxu0 0
      %589 = vmatprep.subr.bf16.mxu0 0
      %590 = vmatpush1.bf16.msra.mxu0 0
      %591 = vmatprep.subr.bf16.mxu0 0
      %592 = vmatpush1.bf16.msra.mxu0 0
      %593 = vmatprep.subr.bf16.mxu0 0
      %594 = vmatpush1.bf16.msra.mxu0 0
      %595 = vmatprep.subr.bf16.mxu0 0
      %596 = vmatpush1.bf16.msra.mxu0 0
      %597 = vmatprep.subr.bf16.mxu0 0
      %598 = vmatpush1.bf16.msra.mxu0 0
      %599 = vmatprep.subr.bf16.mxu0 0
      %600 = vmatpush1.bf16.msra.mxu0 0
      %601 = vmatprep.subr.bf16.mxu0 0
      %602 = vmatpush1.bf16.msra.mxu0 0
      %603 = vmatprep.subr.bf16.mxu0 0
      %604 = vmatpush1.bf16.msra.mxu0 0
      %605 = vmatprep.subr.bf16.mxu0 0
      %606 = vmatpush1.bf16.msra.mxu0 0
      %607 = vmatprep.subr.bf16.mxu0 0
      %608 = vmatpush1.bf16.msra.mxu0 0
      %609 = vmatprep.mubr.bf16.mxu0 0
      %610 = vmatmul.mubr.bf16.gmra.mrb[0].mxu0 %v493
      %v611 = vpop.f32.mrb[0].mxu0
      %v612 = vadd.f32 %v571, %v611
      %v613 = vpop.f32.mrb[0].mxu0
      %v614 = vpop.f32.mrb[0].mxu0
      %v615 = vadd.f32 %v574, %v614
      %v616 = vpop.f32.mrb[0].mxu0
      %617 = vdwg.mxu0
      %v618 = vld [vmem:[%s2] sm:$0xff]
      %v619 = vld [vmem:[%s2 + $0x8] sm:$0xff]
      %621 = vset.pattern.permute.xlu0 0
      %622 = vperm.xlu0 %621, %v618
      %v623 = vpop.permute.xlu0 %622
      %626 = vset.pattern.permute.xlu0 0
      %627 = vperm.xlu0 %626, %v619
      %v628 = vpop.permute.xlu0 %627
      %v630 = vmul.f32 %v612, %v623
      %v631 = vmul.f32 %v615, %v628
      %v632 = vadd.f32 %v630, %v631
      %v633 = vrot.slane %v632, 4
      %v634 = vadd.f32 %v632, %v633
      %v635 = vrot.slane %v634, 2
      %v636 = vadd.f32 %v634, %v635
      %v637 = vrot.slane %v636, 1
      %v638 = vadd.f32 %v636, %v637
      %v639 = vmul.f32 %v630, %v612
      %v640 = vmul.f32 %v631, %v615
      %v641 = vadd.f32 %v639, %v640
      %v642 = vrot.slane %v641, 4
      %v643 = vadd.f32 %v641, %v642
      %v644 = vrot.slane %v643, 2
      %v645 = vadd.f32 %v643, %v644
      %v646 = vrot.slane %v645, 1
      %v647 = vadd.f32 %v645, %v646
      %v648 = vmul.f32 %v638, %v638
      %v649 = vsub.f32 %v647, %v648
      %v650 = vmax.f32 %v649, 0.0
      %v651 = vsub.f32 %v612, %v638
      %v652 = vsub.f32 %v615, %v638
      %v653 = vadd.f32 %v650, 1e-05
      %v654 = vrsqrt.pop %v653
      %v655 = vmul.f32 %v651, %v654
      %v656 = vmul.f32 %v652, %v654
      %vm657 = vcmp.ge.f32.partialorder %v655, 0.0
      %vm658 = vcmp.ge.f32.partialorder %v656, 0.0
      %v659 = vmul.f32 %v655, 0.2
      %v660 = vmul.f32 %v656, 0.2
      %v661 = vsel %vm657, %v655, %v659
      %v662 = vsel %vm658, %v656, %v660
      %v663 = vpack.c.bf16 %v662, %v661
      %v665 = vunpack.c.l.b16 %v663
      %v666 = vunpack.c.h.b16 %v663
      %v667 = vpack.c.b16 %v665, %v665
      %v668 = vpack.c.b16 %v666, %v666
      %671 = vst [vmem:[%s170] sm:$0xf] %v667
      %672 = vst [vmem:[%s170 + $0x4] sm:$0xf] %v668
      %p673 = scmp.lt.s32.totalorder %s14, 1
      %s674 = scalar_select %p673, %s14, 1
      %s675 = smul.addr %s674, 2
      %s676 = smul.addr %s675, 4
      %s677 = scalar_lea.vmem %s3, %s676
      // Predicated region
      $region33: #{discriminator_forward.4} parent=31 // pred_check
        %p678 = pneg %p100
      $region34: #{discriminator_forward.4} parent=31 // pred_check_branch
        %680 = sbr.rel (%p678) target = $region36
      $region35: #{discriminator_forward.4} parent=31 // pred_region
        _
      $region36: #{discriminator_forward.4} parent=31 // pred_fallthru
        _
    $region32: #{discriminator_forward.4} parent=5 // pred_fallthru
      _
    %p681 = scmp.le.s32.totalorder 2, %s9
    // Predicated region
    $region37: #{discriminator_forward.4} parent=5 // pred_check
      %p682 = pneg %p681
    $region38: #{discriminator_forward.4} parent=5 // pred_check_branch
      %684 = sbr.rel (%p682) target = $region40
    $region39: #{discriminator_forward.4} parent=5 // pred_region
      %s685 = ssub.s32 %s9, 2
      // Predicated region
      $region41: #{discriminator_forward.4} parent=39 // pred_check
        %p686 = pneg %p106
      $region42: #{discriminator_forward.4} parent=39 // pred_check_branch
        %688 = sbr.rel (%p686) target = $region44
      $region43: #{discriminator_forward.4} parent=39 // pred_region
        %p689 = scmp.lt.s32.totalorder %s15, 1
        %s690 = scalar_select %p689, %s15, 1
        %s691 = smul.addr %s690, 2
        %s692 = smul.addr %s691, 4
        %s693 = scalar_lea.vmem %s3, %s692
      $region44: #{discriminator_forward.4} parent=39 // pred_fallthru
        _
    $region40: #{discriminator_forward.4} parent=5 // pred_fallthru
      _
  $region6: #{discriminator_forward.4} parent=0 // loop_footer
    %s13 = sadd.s32 1, %s9
  $region7: #{discriminator_forward.4} parent=0 // loop_footer_branch
    %8 = sbr.rel target = $region3
  $region8: #{discriminator_forward.4} parent=0 // loop_exit
    _

// kernel: discriminator_forward.5
$region0: #{discriminator_forward.5}
  #allocation0 [shape = 'u32[]', space=smem, size = 0x4, offset = 0x4, fixed_abs, tag = 'smem constant byte address 0x4 - core index']
  #allocation1 [shape = 'u32[144,128]{1,0:T(1,128)}', space=vmem, size = 0x12000, scoped, tag = 'internal scratch']
  %s0 = inlined_call_operand.vmem [shape: bf16[2,8,1152], index: 0, kind: input, shape index: {}]
  %s1 = inlined_call_operand.vmem [shape: bf16[1152,256], index: 1, kind: input, shape index: {}]
  %s2 = inlined_call_operand.vmem [shape: f32[8,1], index: 2, kind: input, shape index: {}]
  %s3 = inlined_call_operand.vmem [shape: bf16[256,128], index: 3, kind: input, shape index: {}]
  %s4 = inlined_call_operand.vmem [shape: f32[1,128], index: 4, kind: input, shape index: {}]
  %s5 = inlined_call_operand.vmem [shape: f32[2,8,128], index: 5, kind: output, shape index: {}]
  %s6 = sld [smem:[#allocation0]]
  $region53: #{discriminator_forward.5} parent=0
    _
  %s8 = ssub.s32 1, %s6
  %s9 = scalar_select 0, %s8, %s6
  loop: start=0, step=1, limit=4
  $region2: #{discriminator_forward.5} parent=0 // loop_pre_header
    _
  $region3: #{discriminator_forward.5} parent=0 // loop_header
    %s11 = sphi 0, %s15
    %p12 = scmp.ge.s32.totalorder %s11, 4
    %s21 = sphi 0, %s23
    %s24 = sphi 0, %s21
    %s25 = sphi 0, %s24
    %s41 = sphi 0, %s25
    %s45 = sphi 0, %s45
    %s47 = sphi 0, %s45
    %s48 = sphi 0, %s47
    %s62 = sphi 0, %s48
    %s66 = sphi 0, %s66
    %s68 = sphi 0, %s66
    %s69 = sphi 0, %s68
    %s83 = sphi 0, %s69
    %s87 = sphi 0, %s87
    %s89 = sphi 0, %s87
    %s90 = sphi 0, %s89
    %s104 = sphi 0, %s90
    %s108 = sphi 0, %s108
    %s110 = sphi 0, %s108
    %s111 = sphi 0, %s110
    %s125 = sphi 0, %s111
    %s131 = sphi 0, %s133
    %s134 = sphi 0, %s131
    %s135 = sphi 0, %s134
    %s151 = sphi 0, %s135
  $region4: #{discriminator_forward.5} parent=0 // loop_header_branch
    %14 = sbr.rel (%p12) target = $region8
  $region5: #{discriminator_forward.5} parent=0 // loop_body
    %s16 = ssub.s32 %s11, 1
    %s17 = ssub.s32 %s11, 2
    %s18 = sadd.s32 %s11, 1
    %s19 = ssub.s32 %s11, %s18
    %p20 = scmp.eq.s32.totalorder %s19, 0
    %s22 = sadd.s32 %s21, 1
    %s23 = scalar_select %p20, %s21, %s22
    %p26 = pneg %p20
    %p27 = scmp.eq.s32.totalorder %s11, 1
    %p28 = por %p26, %p27
    %p29 = scmp.ne.s32.totalorder %s21, %s24
    %p30 = scmp.eq.s32.totalorder %s11, 0
    %p31 = por %p29, %p30
    %p32 = scmp.ne.s32.totalorder %s21, %s24
    %p33 = scmp.eq.s32.totalorder %s16, 1
    %p34 = por %p32, %p33
    %p35 = scmp.ne.s32.totalorder %s24, %s25
    %p36 = scmp.eq.s32.totalorder %s16, 0
    %p37 = por %p35, %p36
    %p38 = scmp.ne.s32.totalorder %s24, %s25
    %p39 = scmp.eq.s32.totalorder %s17, 1
    %p40 = por %p38, %p39
    %p42 = scmp.ne.s32.totalorder %s25, %s41
    %p43 = scmp.eq.s32.totalorder %s17, 0
    %p44 = por %p42, %p43
    %s46 = sadd.s32 %s45, 1
    %p49 = scmp.eq.s32.totalorder %s11, 1
    %p50 = scmp.ne.s32.totalorder %s45, %s47
    %p51 = scmp.eq.s32.totalorder %s11, 0
    %p52 = por %p50, %p51
    %p53 = scmp.ne.s32.totalorder %s45, %s47
    %p54 = scmp.eq.s32.totalorder %s16, 1
    %p55 = por %p53, %p54
    %p56 = scmp.ne.s32.totalorder %s47, %s48
    %p57 = scmp.eq.s32.totalorder %s16, 0
    %p58 = por %p56, %p57
    %p59 = scmp.ne.s32.totalorder %s47, %s48
    %p60 = scmp.eq.s32.totalorder %s17, 1
    %p61 = por %p59, %p60
    %p63 = scmp.ne.s32.totalorder %s48, %s62
    %p64 = scmp.eq.s32.totalorder %s17, 0
    %p65 = por %p63, %p64
    %s67 = sadd.s32 %s66, 1
    %p70 = scmp.eq.s32.totalorder %s11, 1
    %p71 = scmp.ne.s32.totalorder %s66, %s68
    %p72 = scmp.eq.s32.totalorder %s11, 0
    %p73 = por %p71, %p72
    %p74 = scmp.ne.s32.totalorder %s66, %s68
    %p75 = scmp.eq.s32.totalorder %s16, 1
    %p76 = por %p74, %p75
    %p77 = scmp.ne.s32.totalorder %s68, %s69
    %p78 = scmp.eq.s32.totalorder %s16, 0
    %p79 = por %p77, %p78
    %p80 = scmp.ne.s32.totalorder %s68, %s69
    %p81 = scmp.eq.s32.totalorder %s17, 1
    %p82 = por %p80, %p81
    %p84 = scmp.ne.s32.totalorder %s69, %s83
    %p85 = scmp.eq.s32.totalorder %s17, 0
    %p86 = por %p84, %p85
    %s88 = sadd.s32 %s87, 1
    %p91 = scmp.eq.s32.totalorder %s11, 1
    %p92 = scmp.ne.s32.totalorder %s87, %s89
    %p93 = scmp.eq.s32.totalorder %s11, 0
    %p94 = por %p92, %p93
    %p95 = scmp.ne.s32.totalorder %s87, %s89
    %p96 = scmp.eq.s32.totalorder %s16, 1
    %p97 = por %p95, %p96
    %p98 = scmp.ne.s32.totalorder %s89, %s90
    %p99 = scmp.eq.s32.totalorder %s16, 0
    %p100 = por %p98, %p99
    %p101 = scmp.ne.s32.totalorder %s89, %s90
    %p102 = scmp.eq.s32.totalorder %s17, 1
    %p103 = por %p101, %p102
    %p105 = scmp.ne.s32.totalorder %s90, %s104
    %p106 = scmp.eq.s32.totalorder %s17, 0
    %p107 = por %p105, %p106
    %s109 = sadd.s32 %s108, 1
    %p112 = scmp.eq.s32.totalorder %s11, 1
    %p113 = scmp.ne.s32.totalorder %s108, %s110
    %p114 = scmp.eq.s32.totalorder %s11, 0
    %p115 = por %p113, %p114
    %p116 = scmp.ne.s32.totalorder %s108, %s110
    %p117 = scmp.eq.s32.totalorder %s16, 1
    %p118 = por %p116, %p117
    %p119 = scmp.ne.s32.totalorder %s110, %s111
    %p120 = scmp.eq.s32.totalorder %s16, 0
    %p121 = por %p119, %p120
    %p122 = scmp.ne.s32.totalorder %s110, %s111
    %p123 = scmp.eq.s32.totalorder %s17, 1
    %p124 = por %p122, %p123
    %p126 = scmp.ne.s32.totalorder %s111, %s125
    %p127 = scmp.eq.s32.totalorder %s17, 0
    %p128 = por %p126, %p127
    %s129 = ssub.s32 %s11, %s18
    %p130 = scmp.eq.s32.totalorder %s129, 0
    %s132 = sadd.s32 %s131, 1
    %s133 = scalar_select %p130, %s131, %s132
    %p136 = pneg %p130
    %p137 = scmp.eq.s32.totalorder %s11, 1
    %p138 = por %p136, %p137
    %p139 = scmp.ne.s32.totalorder %s131, %s134
    %p140 = scmp.eq.s32.totalorder %s11, 0
    %p141 = por %p139, %p140
    %p142 = scmp.ne.s32.totalorder %s131, %s134
    %p143 = scmp.eq.s32.totalorder %s16, 1
    %p144 = por %p142, %p143
    %p145 = scmp.ne.s32.totalorder %s134, %s135
    %p146 = scmp.eq.s32.totalorder %s16, 0
    %p147 = por %p145, %p146
    %p148 = scmp.ne.s32.totalorder %s134, %s135
    %p149 = scmp.eq.s32.totalorder %s17, 1
    %p150 = por %p148, %p149
    %p152 = scmp.ne.s32.totalorder %s135, %s151
    %p153 = scmp.eq.s32.totalorder %s17, 0
    %p154 = por %p152, %p153
    %p155 = scmp.le.s32.totalorder 1, %s11
    %p156 = scmp.lt.s32.totalorder %s11, 3
    %p157 = pnand %p155, %p156
    %p158 = pneg %p157
    // Predicated region
    $region9: #{discriminator_forward.5} parent=5 // pred_check
      _
    $region10: #{discriminator_forward.5} parent=5 // pred_check_branch
      %160 = sbr.rel (%p157) target = $region12
    $region11: #{discriminator_forward.5} parent=5 // pred_region
      %s161 = ssub.s32 %s11, 1
      // Predicated region
      $region13: #{discriminator_forward.5} parent=11 // pred_check
        %p162 = pneg %p58
      $region14: #{discriminator_forward.5} parent=11 // pred_check_branch
        %164 = sbr.rel (%p162) target = $region16
      $region15: #{discriminator_forward.5} parent=11 // pred_region
        _
      $region16: #{discriminator_forward.5} parent=11 // pred_fallthru
        _
      // Predicated region
      $region17: #{discriminator_forward.5} parent=11 // pred_check
        %p165 = pneg %p79
      $region18: #{discriminator_forward.5} parent=11 // pred_check_branch
        %167 = sbr.rel (%p165) target = $region20
      $region19: #{discriminator_forward.5} parent=11 // pred_region
        _
      $region20: #{discriminator_forward.5} parent=11 // pred_fallthru
        _
      // Predicated region
      $region21: #{discriminator_forward.5} parent=11 // pred_check
        %p168 = pneg %p100
      $region22: #{discriminator_forward.5} parent=11 // pred_check_branch
        %170 = sbr.rel (%p168) target = $region24
      $region23: #{discriminator_forward.5} parent=11 // pred_region
        _
      $region24: #{discriminator_forward.5} parent=11 // pred_fallthru
        _
      // Predicated region
      $region25: #{discriminator_forward.5} parent=11 // pred_check
        %p171 = pneg %p121
      $region26: #{discriminator_forward.5} parent=11 // pred_check_branch
        %173 = sbr.rel (%p171) target = $region28
      $region27: #{discriminator_forward.5} parent=11 // pred_region
        _
      $region28: #{discriminator_forward.5} parent=11 // pred_fallthru
        _
    $region12: #{discriminator_forward.5} parent=5 // pred_fallthru
      _
    %p174 = scmp.lt.s32.totalorder %s11, 2
    // Predicated region
    $region29: #{discriminator_forward.5} parent=5 // pred_check
      %p175 = pneg %p174
    $region30: #{discriminator_forward.5} parent=5 // pred_check_branch
      %177 = sbr.rel (%p175) target = $region32
    $region31: #{discriminator_forward.5} parent=5 // pred_region
      // Predicated region
      $region33: #{discriminator_forward.5} parent=31 // pred_check
        %p178 = pneg %p31
      $region34: #{discriminator_forward.5} parent=31 // pred_check_branch
        %180 = sbr.rel (%p178) target = $region36
      $region35: #{discriminator_forward.5} parent=31 // pred_region
        %p181 = scmp.lt.s32.totalorder %s11, 1
        %s182 = scalar_select %p181, %s11, 1
        %s183 = smul.addr %s182, 9
        %s184 = smul.addr %s183, 4
        %s185 = scalar_lea.vmem %s0, %s184
      $region36: #{discriminator_forward.5} parent=31 // pred_fallthru
        _
    $region32: #{discriminator_forward.5} parent=5 // pred_fallthru
      _
    %p186 = scmp.le.s32.totalorder 1, %s11
    %p187 = scmp.lt.s32.totalorder %s11, 3
    %p188 = pnand %p186, %p187
    %p189 = pneg %p188
    // Predicated region
    $region37: #{discriminator_forward.5} parent=5 // pred_check
      _
    $region38: #{discriminator_forward.5} parent=5 // pred_check_branch
      %191 = sbr.rel (%p188) target = $region40
    $region39: #{discriminator_forward.5} parent=5 // pred_region
      %s192 = ssub.s32 %s11, 1
      %p193 = scmp.lt.s32.totalorder %s16, 1
      %s194 = scalar_select %p193, %s16, 1
      %s195 = smul.addr %s194, 9
      %s196 = smul.addr %s195, 4
      %s197 = scalar_lea.vmem %s0, %s196
      %p198 = pneg %p37
      %p199 = pneg %p34
      %p200 = pneg %p58
      %p201 = pneg %p55
      %p202 = pneg %p79
      %p203 = pneg %p76
      %p204 = pneg %p100
      %p205 = pneg %p97
      %p206 = pneg %p121
      %p207 = pneg %p118
      %p208 = pneg %p147
      %p209 = pneg %p144
      %p210 = scmp.lt.s32.totalorder %s16, 1
      %s211 = scalar_select %p210, %s16, 1
      %s212 = smul.addr %s211, 8
      %s213 = scalar_lea.vmem %s5, %s212
      %p214 = scmp.lt.s32.totalorder %s16, 1
      %s215 = scalar_select %p214, %s16, 1
      %s216 = smul.addr %s215, 9
      %s217 = smul.addr %s216, 4
      %s218 = scalar_lea.vmem %s0, %s217
      %p219 = scmp.lt.s32.totalorder %s16, 1
      %s220 = scalar_select %p219, %s16, 1
      %s221 = smul.addr %s220, 8
      %s222 = scalar_lea.vmem %s5, %s221
      %v224 = vld [vmem:[%s218] sm:$0xff]
      %v225 = vld [vmem:[%s218 + $0x8] sm:$0xff]
      %v226 = vld [vmem:[%s218 + $0x10] sm:$0xff]
      %v227 = vld [vmem:[%s218 + $0x18] sm:$0xff]
      %v228 = vld [vmem:[%s218 + $0x20] sm:$0xf]
      %v229 = vld [vmem:[%s1] sm:$0xff]
      %v230 = vld [vmem:[%s1 + $0x8] sm:$0xff]
      %v231 = vld [vmem:[%s1 + $0x10] sm:$0xff]
      %v232 = vld [vmem:[%s1 + $0x18] sm:$0xff]
      %v233 = vld [vmem:[%s1 + $0x20] sm:$0xff]
      %v234 = vld [vmem:[%s1 + $0x28] sm:$0xff]
      %v235 = vld [vmem:[%s1 + $0x30] sm:$0xff]
      %v236 = vld [vmem:[%s1 + $0x38] sm:$0xff]
      %v237 = vld [vmem:[%s1 + $0x40] sm:$0xff]
      %v238 = vld [vmem:[%s1 + $0x48] sm:$0xff]
      %v239 = vld [vmem:[%s1 + $0x50] sm:$0xff]
      %v240 = vld [vmem:[%s1 + $0x58] sm:$0xff]
      %v241 = vld [vmem:[%s1 + $0x60] sm:$0xff]
      %v242 = vld [vmem:[%s1 + $0x68] sm:$0xff]
      %v243 = vld [vmem:[%s1 + $0x70] sm:$0xff]
      %v244 = vld [vmem:[%s1 + $0x78] sm:$0xff]
      %v245 = vld [vmem:[%s1 + $0x80] sm:$0xff]
      %v246 = vld [vmem:[%s1 + $0x88] sm:$0xff]
      %v247 = vld [vmem:[%s1 + $0x90] sm:$0xff]
      %v248 = vld [vmem:[%s1 + $0x98] sm:$0xff]
      %v249 = vld [vmem:[%s1 + $0xa0] sm:$0xff]
      %v250 = vld [vmem:[%s1 + $0xa8] sm:$0xff]
      %v251 = vld [vmem:[%s1 + $0xb0] sm:$0xff]
      %v252 = vld [vmem:[%s1 + $0xb8] sm:$0xff]
      %v253 = vld [vmem:[%s1 + $0xc0] sm:$0xff]
      %v254 = vld [vmem:[%s1 + $0xc8] sm:$0xff]
      %v255 = vld [vmem:[%s1 + $0xd0] sm:$0xff]
      %v256 = vld [vmem:[%s1 + $0xd8] sm:$0xff]
      %v257 = vld [vmem:[%s1 + $0xe0] sm:$0xff]
      %v258 = vld [vmem:[%s1 + $0xe8] sm:$0xff]
      %v259 = vld [vmem:[%s1 + $0xf0] sm:$0xff]
      %v260 = vld [vmem:[%s1 + $0xf8] sm:$0xff]
      %v261 = vld [vmem:[%s1 + $0x100] sm:$0xff]
      %v262 = vld [vmem:[%s1 + $0x108] sm:$0xff]
      %v263 = vld [vmem:[%s1 + $0x110] sm:$0xff]
      %v264 = vld [vmem:[%s1 + $0x118] sm:$0xff]
      %v265 = vld [vmem:[%s1 + $0x120] sm:$0xff]
      %v266 = vld [vmem:[%s1 + $0x128] sm:$0xff]
      %v267 = vld [vmem:[%s1 + $0x130] sm:$0xff]
      %v268 = vld [vmem:[%s1 + $0x138] sm:$0xff]
      %v269 = vld [vmem:[%s1 + $0x140] sm:$0xff]
      %v270 = vld [vmem:[%s1 + $0x148] sm:$0xff]
      %v271 = vld [vmem:[%s1 + $0x150] sm:$0xff]
      %v272 = vld [vmem:[%s1 + $0x158] sm:$0xff]
      %v273 = vld [vmem:[%s1 + $0x160] sm:$0xff]
      %v274 = vld [vmem:[%s1 + $0x168] sm:$0xff]
      %v275 = vld [vmem:[%s1 + $0x170] sm:$0xff]
      %v276 = vld [vmem:[%s1 + $0x178] sm:$0xff]
      %v277 = vld [vmem:[%s1 + $0x180] sm:$0xff]
      %v278 = vld [vmem:[%s1 + $0x188] sm:$0xff]
      %v279 = vld [vmem:[%s1 + $0x190] sm:$0xff]
      %v280 = vld [vmem:[%s1 + $0x198] sm:$0xff]
      %v281 = vld [vmem:[%s1 + $0x1a0] sm:$0xff]
      %v282 = vld [vmem:[%s1 + $0x1a8] sm:$0xff]
      %v283 = vld [vmem:[%s1 + $0x1b0] sm:$0xff]
      %v284 = vld [vmem:[%s1 + $0x1b8] sm:$0xff]
      %v285 = vld [vmem:[%s1 + $0x1c0] sm:$0xff]
      %v286 = vld [vmem:[%s1 + $0x1c8] sm:$0xff]
      %v287 = vld [vmem:[%s1 + $0x1d0] sm:$0xff]
      %v288 = vld [vmem:[%s1 + $0x1d8] sm:$0xff]
      %v289 = vld [vmem:[%s1 + $0x1e0] sm:$0xff]
      %v290 = vld [vmem:[%s1 + $0x1e8] sm:$0xff]
      %v291 = vld [vmem:[%s1 + $0x1f0] sm:$0xff]
      %v292 = vld [vmem:[%s1 + $0x1f8] sm:$0xff]
      %v293 = vld [vmem:[%s1 + $0x200] sm:$0xff]
      %v294 = vld [vmem:[%s1 + $0x208] sm:$0xff]
      %v295 = vld [vmem:[%s1 + $0x210] sm:$0xff]
      %v296 = vld [vmem:[%s1 + $0x218] sm:$0xff]
      %v297 = vld [vmem:[%s1 + $0x220] sm:$0xff]
      %v298 = vld [vmem:[%s1 + $0x228] sm:$0xff]
      %v299 = vld [vmem:[%s1 + $0x230] sm:$0xff]
      %v300 = vld [vmem:[%s1 + $0x238] sm:$0xff]
      %v301 = vld [vmem:[%s1 + $0x240] sm:$0xff]
      %v302 = vld [vmem:[%s1 + $0x248] sm:$0xff]
      %v303 = vld [vmem:[%s1 + $0x250] sm:$0xff]
      %v304 = vld [vmem:[%s1 + $0x258] sm:$0xff]
      %v305 = vld [vmem:[%s1 + $0x260] sm:$0xff]
      %v306 = vld [vmem:[%s1 + $0x268] sm:$0xff]
      %v307 = vld [vmem:[%s1 + $0x270] sm:$0xff]
      %v308 = vld [vmem:[%s1 + $0x278] sm:$0xff]
      %v309 = vld [vmem:[%s1 + $0x280] sm:$0xff]
      %v310 = vld [vmem:[%s1 + $0x288] sm:$0xff]
      %v311 = vld [vmem:[%s1 + $0x290] sm:$0xff]
      %v312 = vld [vmem:[%s1 + $0x298] sm:$0xff]
      %v313 = vld [vmem:[%s1 + $0x2a0] sm:$0xff]
      %v314 = vld [vmem:[%s1 + $0x2a8] sm:$0xff]
      %v315 = vld [vmem:[%s1 + $0x2b0] sm:$0xff]
      %v316 = vld [vmem:[%s1 + $0x2b8] sm:$0xff]
      %v317 = vld [vmem:[%s1 + $0x2c0] sm:$0xff]
      %v318 = vld [vmem:[%s1 + $0x2c8] sm:$0xff]
      %v319 = vld [vmem:[%s1 + $0x2d0] sm:$0xff]
      %v320 = vld [vmem:[%s1 + $0x2d8] sm:$0xff]
      %v321 = vld [vmem:[%s1 + $0x2e0] sm:$0xff]
      %v322 = vld [vmem:[%s1 + $0x2e8] sm:$0xff]
      %v323 = vld [vmem:[%s1 + $0x2f0] sm:$0xff]
      %v324 = vld [vmem:[%s1 + $0x2f8] sm:$0xff]
      %v325 = vld [vmem:[%s1 + $0x300] sm:$0xff]
      %v326 = vld [vmem:[%s1 + $0x308] sm:$0xff]
      %v327 = vld [vmem:[%s1 + $0x310] sm:$0xff]
      %v328 = vld [vmem:[%s1 + $0x318] sm:$0xff]
      %v329 = vld [vmem:[%s1 + $0x320] sm:$0xff]
      %v330 = vld [vmem:[%s1 + $0x328] sm:$0xff]
      %v331 = vld [vmem:[%s1 + $0x330] sm:$0xff]
      %v332 = vld [vmem:[%s1 + $0x338] sm:$0xff]
      %v333 = vld [vmem:[%s1 + $0x340] sm:$0xff]
      %v334 = vld [vmem:[%s1 + $0x348] sm:$0xff]
      %v335 = vld [vmem:[%s1 + $0x350] sm:$0xff]
      %v336 = vld [vmem:[%s1 + $0x358] sm:$0xff]
      %v337 = vld [vmem:[%s1 + $0x360] sm:$0xff]
      %v338 = vld [vmem:[%s1 + $0x368] sm:$0xff]
      %v339 = vld [vmem:[%s1 + $0x370] sm:$0xff]
      %v340 = vld [vmem:[%s1 + $0x378] sm:$0xff]
      %v341 = vld [vmem:[%s1 + $0x380] sm:$0xff]
      %v342 = vld [vmem:[%s1 + $0x388] sm:$0xff]
      %v343 = vld [vmem:[%s1 + $0x390] sm:$0xff]
      %v344 = vld [vmem:[%s1 + $0x398] sm:$0xff]
      %v345 = vld [vmem:[%s1 + $0x3a0] sm:$0xff]
      %v346 = vld [vmem:[%s1 + $0x3a8] sm:$0xff]
      %v347 = vld [vmem:[%s1 + $0x3b0] sm:$0xff]
      %v348 = vld [vmem:[%s1 + $0x3b8] sm:$0xff]
      %v349 = vld [vmem:[%s1 + $0x3c0] sm:$0xff]
      %v350 = vld [vmem:[%s1 + $0x3c8] sm:$0xff]
      %v351 = vld [vmem:[%s1 + $0x3d0] sm:$0xff]
      %v352 = vld [vmem:[%s1 + $0x3d8] sm:$0xff]
      %v353 = vld [vmem:[%s1 + $0x3e0] sm:$0xff]
      %v354 = vld [vmem:[%s1 + $0x3e8] sm:$0xff]
      %v355 = vld [vmem:[%s1 + $0x3f0] sm:$0xff]
      %v356 = vld [vmem:[%s1 + $0x3f8] sm:$0xff]
      %v357 = vld [vmem:[%s1 + $0x400] sm:$0xff]
      %v358 = vld [vmem:[%s1 + $0x408] sm:$0xff]
      %v359 = vld [vmem:[%s1 + $0x410] sm:$0xff]
      %v360 = vld [vmem:[%s1 + $0x418] sm:$0xff]
      %v361 = vld [vmem:[%s1 + $0x420] sm:$0xff]
      %v362 = vld [vmem:[%s1 + $0x428] sm:$0xff]
      %v363 = vld [vmem:[%s1 + $0x430] sm:$0xff]
      %v364 = vld [vmem:[%s1 + $0x438] sm:$0xff]
      %v365 = vld [vmem:[%s1 + $0x440] sm:$0xff]
      %v366 = vld [vmem:[%s1 + $0x448] sm:$0xff]
      %v367 = vld [vmem:[%s1 + $0x450] sm:$0xff]
      %v368 = vld [vmem:[%s1 + $0x458] sm:$0xff]
      %v369 = vld [vmem:[%s1 + $0x460] sm:$0xff]
      %v370 = vld [vmem:[%s1 + $0x468] sm:$0xff]
      %v371 = vld [vmem:[%s1 + $0x470] sm:$0xff]
      %v372 = vld [vmem:[%s1 + $0x478] sm:$0xff]
      %v378 = vunpack.c.l.b16 %v224
      %v379 = vunpack.c.h.b16 %v224
      %v380 = vunpack.c.l.b16 %v225
      %v381 = vunpack.c.h.b16 %v225
      %v382 = vunpack.c.l.b16 %v226
      %v383 = vunpack.c.h.b16 %v226
      %v384 = vunpack.c.l.b16 %v227
      %v385 = vunpack.c.h.b16 %v227
      %v386 = vunpack.c.l.b16 %v228
      %v387 = vpack.c.b16 %v378, %v378
      %v388 = vpack.c.b16 %v379, %v379
      %v389 = vpack.c.b16 %v380, %v380
      %v390 = vpack.c.b16 %v381, %v381
      %v391 = vpack.c.b16 %v382, %v382
      %v392 = vpack.c.b16 %v383, %v383
      %v393 = vpack.c.b16 %v384, %v384
      %v394 = vpack.c.b16 %v385, %v385
      %v395 = vpack.c.b16 %v386, %v386
      %v549 = vunpack.c.l.b16 %v229
      %v550 = vunpack.c.h.b16 %v229
      %v551 = vunpack.c.l.b16 %v230
      %v552 = vunpack.c.h.b16 %v230
      %v553 = vunpack.c.l.b16 %v231
      %v554 = vunpack.c.h.b16 %v231
      %v555 = vunpack.c.l.b16 %v232
      %v556 = vunpack.c.h.b16 %v232
      %v557 = vunpack.c.l.b16 %v233
      %v558 = vunpack.c.h.b16 %v233
      %v559 = vunpack.c.l.b16 %v234
      %v560 = vunpack.c.h.b16 %v234
      %v561 = vunpack.c.l.b16 %v235
      %v562 = vunpack.c.h.b16 %v235
      %v563 = vunpack.c.l.b16 %v236
      %v564 = vunpack.c.h.b16 %v236
      %v565 = vunpack.c.l.b16 %v237
      %v566 = vunpack.c.h.b16 %v237
      %v567 = vunpack.c.l.b16 %v238
      %v568 = vunpack.c.h.b16 %v238
      %v569 = vunpack.c.l.b16 %v239
      %v570 = vunpack.c.h.b16 %v239
      %v571 = vunpack.c.l.b16 %v240
      %v572 = vunpack.c.h.b16 %v240
      %v573 = vunpack.c.l.b16 %v241
      %v574 = vunpack.c.h.b16 %v241
      %v575 = vunpack.c.l.b16 %v242
      %v576 = vunpack.c.h.b16 %v242
      %v577 = vunpack.c.l.b16 %v243
      %v578 = vunpack.c.h.b16 %v243
      %v579 = vunpack.c.l.b16 %v244
      %v580 = vunpack.c.h.b16 %v244
      %v581 = vunpack.c.l.b16 %v245
      %v582 = vunpack.c.h.b16 %v245
      %v583 = vunpack.c.l.b16 %v246
      %v584 = vunpack.c.h.b16 %v246
      %v585 = vunpack.c.l.b16 %v247
      %v586 = vunpack.c.h.b16 %v247
      %v587 = vunpack.c.l.b16 %v248
      %v588 = vunpack.c.h.b16 %v248
      %v589 = vunpack.c.l.b16 %v249
      %v590 = vunpack.c.h.b16 %v249
      %v591 = vunpack.c.l.b16 %v250
      %v592 = vunpack.c.h.b16 %v250
      %v593 = vunpack.c.l.b16 %v251
      %v594 = vunpack.c.h.b16 %v251
      %v595 = vunpack.c.l.b16 %v252
      %v596 = vunpack.c.h.b16 %v252
      %v597 = vunpack.c.l.b16 %v253
      %v598 = vunpack.c.h.b16 %v253
      %v599 = vunpack.c.l.b16 %v254
      %v600 = vunpack.c.h.b16 %v254
      %v601 = vunpack.c.l.b16 %v255
      %v602 = vunpack.c.h.b16 %v255
      %v603 = vunpack.c.l.b16 %v256
      %v604 = vunpack.c.h.b16 %v256
      %v605 = vunpack.c.l.b16 %v257
      %v606 = vunpack.c.h.b16 %v257
      %v607 = vunpack.c.l.b16 %v258
      %v608 = vunpack.c.h.b16 %v258
      %v609 = vunpack.c.l.b16 %v259
      %v610 = vunpack.c.h.b16 %v259
      %v611 = vunpack.c.l.b16 %v260
      %v612 = vunpack.c.h.b16 %v260
      %v613 = vunpack.c.l.b16 %v261
      %v614 = vunpack.c.h.b16 %v261
      %v615 = vunpack.c.l.b16 %v262
      %v616 = vunpack.c.h.b16 %v262
      %v617 = vunpack.c.l.b16 %v263
      %v618 = vunpack.c.h.b16 %v263
      %v619 = vunpack.c.l.b16 %v264
      %v620 = vunpack.c.h.b16 %v264
      %v621 = vunpack.c.l.b16 %v265
      %v622 = vunpack.c.h.b16 %v265
      %v623 = vunpack.c.l.b16 %v266
      %v624 = vunpack.c.h.b16 %v266
      %v625 = vunpack.c.l.b16 %v267
      %v626 = vunpack.c.h.b16 %v267
      %v627 = vunpack.c.l.b16 %v268
      %v628 = vunpack.c.h.b16 %v268
      %v629 = vunpack.c.l.b16 %v269
      %v630 = vunpack.c.h.b16 %v269
      %v631 = vunpack.c.l.b16 %v270
      %v632 = vunpack.c.h.b16 %v270
      %v633 = vunpack.c.l.b16 %v271
      %v634 = vunpack.c.h.b16 %v271
      %v635 = vunpack.c.l.b16 %v272
      %v636 = vunpack.c.h.b16 %v272
      %v637 = vunpack.c.l.b16 %v273
      %v638 = vunpack.c.h.b16 %v273
      %v639 = vunpack.c.l.b16 %v274
      %v640 = vunpack.c.h.b16 %v274
      %v641 = vunpack.c.l.b16 %v275
      %v642 = vunpack.c.h.b16 %v275
      %v643 = vunpack.c.l.b16 %v276
      %v644 = vunpack.c.h.b16 %v276
      %v645 = vunpack.c.l.b16 %v277
      %v646 = vunpack.c.h.b16 %v277
      %v647 = vunpack.c.l.b16 %v278
      %v648 = vunpack.c.h.b16 %v278
      %v649 = vunpack.c.l.b16 %v279
      %v650 = vunpack.c.h.b16 %v279
      %v651 = vunpack.c.l.b16 %v280
      %v652 = vunpack.c.h.b16 %v280
      %v653 = vunpack.c.l.b16 %v281
      %v654 = vunpack.c.h.b16 %v281
      %v655 = vunpack.c.l.b16 %v282
      %v656 = vunpack.c.h.b16 %v282
      %v657 = vunpack.c.l.b16 %v283
      %v658 = vunpack.c.h.b16 %v283
      %v659 = vunpack.c.l.b16 %v284
      %v660 = vunpack.c.h.b16 %v284
      %v661 = vunpack.c.l.b16 %v285
      %v662 = vunpack.c.h.b16 %v285
      %v663 = vunpack.c.l.b16 %v286
      %v664 = vunpack.c.h.b16 %v286
      %v665 = vunpack.c.l.b16 %v287
      %v666 = vunpack.c.h.b16 %v287
      %v667 = vunpack.c.l.b16 %v288
      %v668 = vunpack.c.h.b16 %v288
      %v669 = vunpack.c.l.b16 %v289
      %v670 = vunpack.c.h.b16 %v289
      %v671 = vunpack.c.l.b16 %v290
      %v672 = vunpack.c.h.b16 %v290
      %v673 = vunpack.c.l.b16 %v291
      %v674 = vunpack.c.h.b16 %v291
      %v675 = vunpack.c.l.b16 %v292
      %v676 = vunpack.c.h.b16 %v292
      %v677 = vunpack.c.l.b16 %v293
      %v678 = vunpack.c.h.b16 %v293
      %v679 = vunpack.c.l.b16 %v294
      %v680 = vunpack.c.h.b16 %v294
      %v681 = vunpack.c.l.b16 %v295
      %v682 = vunpack.c.h.b16 %v295
      %v683 = vunpack.c.l.b16 %v296
      %v684 = vunpack.c.h.b16 %v296
      %v685 = vunpack.c.l.b16 %v297
      %v686 = vunpack.c.h.b16 %v297
      %v687 = vunpack.c.l.b16 %v298
      %v688 = vunpack.c.h.b16 %v298
      %v689 = vunpack.c.l.b16 %v299
      %v690 = vunpack.c.h.b16 %v299
      %v691 = vunpack.c.l.b16 %v300
      %v692 = vunpack.c.h.b16 %v300
      %v693 = vunpack.c.l.b16 %v301
      %v694 = vunpack.c.h.b16 %v301
      %v695 = vunpack.c.l.b16 %v302
      %v696 = vunpack.c.h.b16 %v302
      %v697 = vunpack.c.l.b16 %v303
      %v698 = vunpack.c.h.b16 %v303
      %v699 = vunpack.c.l.b16 %v304
      %v700 = vunpack.c.h.b16 %v304
      %v701 = vunpack.c.l.b16 %v305
      %v702 = vunpack.c.h.b16 %v305
      %v703 = vunpack.c.l.b16 %v306
      %v704 = vunpack.c.h.b16 %v306
      %v705 = vunpack.c.l.b16 %v307
      %v706 = vunpack.c.h.b16 %v307
      %v707 = vunpack.c.l.b16 %v308
      %v708 = vunpack.c.h.b16 %v308
      %v709 = vunpack.c.l.b16 %v309
      %v710 = vunpack.c.h.b16 %v309
      %v711 = vunpack.c.l.b16 %v310
      %v712 = vunpack.c.h.b16 %v310
      %v713 = vunpack.c.l.b16 %v311
      %v714 = vunpack.c.h.b16 %v311
      %v715 = vunpack.c.l.b16 %v312
      %v716 = vunpack.c.h.b16 %v312
      %v717 = vunpack.c.l.b16 %v313
      %v718 = vunpack.c.h.b16 %v313
      %v719 = vunpack.c.l.b16 %v314
      %v720 = vunpack.c.h.b16 %v314
      %v721 = vunpack.c.l.b16 %v315
      %v722 = vunpack.c.h.b16 %v315
      %v723 = vunpack.c.l.b16 %v316
      %v724 = vunpack.c.h.b16 %v316
      %v725 = vunpack.c.l.b16 %v317
      %v726 = vunpack.c.h.b16 %v317
      %v727 = vunpack.c.l.b16 %v318
      %v728 = vunpack.c.h.b16 %v318
      %v729 = vunpack.c.l.b16 %v319
      %v730 = vunpack.c.h.b16 %v319
      %v731 = vunpack.c.l.b16 %v320
      %v732 = vunpack.c.h.b16 %v320
      %v733 = vunpack.c.l.b16 %v321
      %v734 = vunpack.c.h.b16 %v321
      %v735 = vunpack.c.l.b16 %v322
      %v736 = vunpack.c.h.b16 %v322
      %v737 = vunpack.c.l.b16 %v323
      %v738 = vunpack.c.h.b16 %v323
      %v739 = vunpack.c.l.b16 %v324
      %v740 = vunpack.c.h.b16 %v324
      %v741 = vunpack.c.l.b16 %v325
      %v742 = vunpack.c.h.b16 %v325
      %v743 = vunpack.c.l.b16 %v326
      %v744 = vunpack.c.h.b16 %v326
      %v745 = vunpack.c.l.b16 %v327
      %v746 = vunpack.c.h.b16 %v327
      %v747 = vunpack.c.l.b16 %v328
      %v748 = vunpack.c.h.b16 %v328
      %v749 = vunpack.c.l.b16 %v329
      %v750 = vunpack.c.h.b16 %v329
      %v751 = vunpack.c.l.b16 %v330
      %v752 = vunpack.c.h.b16 %v330
      %v753 = vunpack.c.l.b16 %v331
      %v754 = vunpack.c.h.b16 %v331
      %v755 = vunpack.c.l.b16 %v332
      %v756 = vunpack.c.h.b16 %v332
      %v757 = vunpack.c.l.b16 %v333
      %v758 = vunpack.c.h.b16 %v333
      %v759 = vunpack.c.l.b16 %v334
      %v760 = vunpack.c.h.b16 %v334
      %v761 = vunpack.c.l.b16 %v335
      %v762 = vunpack.c.h.b16 %v335
      %v763 = vunpack.c.l.b16 %v336
      %v764 = vunpack.c.h.b16 %v336
      %v765 = vunpack.c.l.b16 %v337
      %v766 = vunpack.c.h.b16 %v337
      %v767 = vunpack.c.l.b16 %v338
      %v768 = vunpack.c.h.b16 %v338
      %v769 = vunpack.c.l.b16 %v339
      %v770 = vunpack.c.h.b16 %v339
      %v771 = vunpack.c.l.b16 %v340
      %v772 = vunpack.c.h.b16 %v340
      %v773 = vunpack.c.l.b16 %v341
      %v774 = vunpack.c.h.b16 %v341
      %v775 = vunpack.c.l.b16 %v342
      %v776 = vunpack.c.h.b16 %v342
      %v777 = vunpack.c.l.b16 %v343
      %v778 = vunpack.c.h.b16 %v343
      %v779 = vunpack.c.l.b16 %v344
      %v780 = vunpack.c.h.b16 %v344
      %v781 = vunpack.c.l.b16 %v345
      %v782 = vunpack.c.h.b16 %v345
      %v783 = vunpack.c.l.b16 %v346
      %v784 = vunpack.c.h.b16 %v346
      %v785 = vunpack.c.l.b16 %v347
      %v786 = vunpack.c.h.b16 %v347
      %v787 = vunpack.c.l.b16 %v348
      %v788 = vunpack.c.h.b16 %v348
      %v789 = vunpack.c.l.b16 %v349
      %v790 = vunpack.c.h.b16 %v349
      %v791 = vunpack.c.l.b16 %v350
      %v792 = vunpack.c.h.b16 %v350
      %v793 = vunpack.c.l.b16 %v351
      %v794 = vunpack.c.h.b16 %v351
      %v795 = vunpack.c.l.b16 %v352
      %v796 = vunpack.c.h.b16 %v352
      %v797 = vunpack.c.l.b16 %v353
      %v798 = vunpack.c.h.b16 %v353
      %v799 = vunpack.c.l.b16 %v354
      %v800 = vunpack.c.h.b16 %v354
      %v801 = vunpack.c.l.b16 %v355
      %v802 = vunpack.c.h.b16 %v355
      %v803 = vunpack.c.l.b16 %v356
      %v804 = vunpack.c.h.b16 %v356
      %v805 = vunpack.c.l.b16 %v357
      %v806 = vunpack.c.h.b16 %v357
      %v807 = vunpack.c.l.b16 %v358
      %v808 = vunpack.c.h.b16 %v358
      %v809 = vunpack.c.l.b16 %v359
      %v810 = vunpack.c.h.b16 %v359
      %v811 = vunpack.c.l.b16 %v360
      %v812 = vunpack.c.h.b16 %v360
      %v813 = vunpack.c.l.b16 %v361
      %v814 = vunpack.c.h.b16 %v361
      %v815 = vunpack.c.l.b16 %v362
      %v816 = vunpack.c.h.b16 %v362
      %v817 = vunpack.c.l.b16 %v363
      %v818 = vunpack.c.h.b16 %v363
      %v819 = vunpack.c.l.b16 %v364
      %v820 = vunpack.c.h.b16 %v364
      %v821 = vunpack.c.l.b16 %v365
      %v822 = vunpack.c.h.b16 %v365
      %v823 = vunpack.c.l.b16 %v366
      %v824 = vunpack.c.h.b16 %v366
      %v825 = vunpack.c.l.b16 %v367
      %v826 = vunpack.c.h.b16 %v367
      %v827 = vunpack.c.l.b16 %v368
      %v828 = vunpack.c.h.b16 %v368
      %v829 = vunpack.c.l.b16 %v369
      %v830 = vunpack.c.h.b16 %v369
      %v831 = vunpack.c.l.b16 %v370
      %v832 = vunpack.c.h.b16 %v370
      %v833 = vunpack.c.l.b16 %v371
      %v834 = vunpack.c.h.b16 %v371
      %v835 = vunpack.c.l.b16 %v372
      %v836 = vunpack.c.h.b16 %v372
      %v837 = vpack.c.b16 %v551, %v549
      %v838 = vpack.c.b16 %v552, %v550
      %v839 = vpack.c.b16 %v555, %v553
      %v840 = vpack.c.b16 %v556, %v554
      %v841 = vpack.c.b16 %v559, %v557
      %v842 = vpack.c.b16 %v560, %v558
      %v843 = vpack.c.b16 %v563, %v561
      %v844 = vpack.c.b16 %v564, %v562
      %v845 = vpack.c.b16 %v567, %v565
      %v846 = vpack.c.b16 %v568, %v566
      %v847 = vpack.c.b16 %v571, %v569
      %v848 = vpack.c.b16 %v572, %v570
      %v849 = vpack.c.b16 %v575, %v573
      %v850 = vpack.c.b16 %v576, %v574
      %v851 = vpack.c.b16 %v579, %v577
      %v852 = vpack.c.b16 %v580, %v578
      %v853 = vpack.c.b16 %v583, %v581
      %v854 = vpack.c.b16 %v584, %v582
      %v855 = vpack.c.b16 %v587, %v585
      %v856 = vpack.c.b16 %v588, %v586
      %v857 = vpack.c.b16 %v591, %v589
      %v858 = vpack.c.b16 %v592, %v590
      %v859 = vpack.c.b16 %v595, %v593
      %v860 = vpack.c.b16 %v596, %v594
      %v861 = vpack.c.b16 %v599, %v597
      %v862 = vpack.c.b16 %v600, %v598
      %v863 = vpack.c.b16 %v603, %v601
      %v864 = vpack.c.b16 %v604, %v602
      %v865 = vpack.c.b16 %v607, %v605
      %v866 = vpack.c.b16 %v608, %v606
      %v867 = vpack.c.b16 %v611, %v609
      %v868 = vpack.c.b16 %v612, %v610
      %v869 = vpack.c.b16 %v615, %v613
      %v870 = vpack.c.b16 %v616, %v614
      %v871 = vpack.c.b16 %v619, %v617
      %v872 = vpack.c.b16 %v620, %v618
      %v873 = vpack.c.b16 %v623, %v621
      %v874 = vpack.c.b16 %v624, %v622
      %v875 = vpack.c.b16 %v627, %v625
      %v876 = vpack.c.b16 %v628, %v626
      %v877 = vpack.c.b16 %v631, %v629
      %v878 = vpack.c.b16 %v632, %v630
      %v879 = vpack.c.b16 %v635, %v633
      %v880 = vpack.c.b16 %v636, %v634
      %v881 = vpack.c.b16 %v639, %v637
      %v882 = vpack.c.b16 %v640, %v638
      %v883 = vpack.c.b16 %v643, %v641
      %v884 = vpack.c.b16 %v644, %v642
      %v885 = vpack.c.b16 %v647, %v645
      %v886 = vpack.c.b16 %v648, %v646
      %v887 = vpack.c.b16 %v651, %v649
      %v888 = vpack.c.b16 %v652, %v650
      %v889 = vpack.c.b16 %v655, %v653
      %v890 = vpack.c.b16 %v656, %v654
      %v891 = vpack.c.b16 %v659, %v657
      %v892 = vpack.c.b16 %v660, %v658
      %v893 = vpack.c.b16 %v663, %v661
      %v894 = vpack.c.b16 %v664, %v662
      %v895 = vpack.c.b16 %v667, %v665
      %v896 = vpack.c.b16 %v668, %v666
      %v897 = vpack.c.b16 %v671, %v669
      %v898 = vpack.c.b16 %v672, %v670
      %v899 = vpack.c.b16 %v675, %v673
      %v900 = vpack.c.b16 %v676, %v674
      %v901 = vpack.c.b16 %v679, %v677
      %v902 = vpack.c.b16 %v680, %v678
      %v903 = vpack.c.b16 %v683, %v681
      %v904 = vpack.c.b16 %v684, %v682
      %v905 = vpack.c.b16 %v687, %v685
      %v906 = vpack.c.b16 %v688, %v686
      %v907 = vpack.c.b16 %v691, %v689
      %v908 = vpack.c.b16 %v692, %v690
      %v909 = vpack.c.b16 %v695, %v693
      %v910 = vpack.c.b16 %v696, %v694
      %v911 = vpack.c.b16 %v699, %v697
      %v912 = vpack.c.b16 %v700, %v698
      %v913 = vpack.c.b16 %v703, %v701
      %v914 = vpack.c.b16 %v704, %v702
      %v915 = vpack.c.b16 %v707, %v705
      %v916 = vpack.c.b16 %v708, %v706
      %v917 = vpack.c.b16 %v711, %v709
      %v918 = vpack.c.b16 %v712, %v710
      %v919 = vpack.c.b16 %v715, %v713
      %v920 = vpack.c.b16 %v716, %v714
      %v921 = vpack.c.b16 %v719, %v717
      %v922 = vpack.c.b16 %v720, %v718
      %v923 = vpack.c.b16 %v723, %v721
      %v924 = vpack.c.b16 %v724, %v722
      %v925 = vpack.c.b16 %v727, %v725
      %v926 = vpack.c.b16 %v728, %v726
      %v927 = vpack.c.b16 %v731, %v729
      %v928 = vpack.c.b16 %v732, %v730
      %v929 = vpack.c.b16 %v735, %v733
      %v930 = vpack.c.b16 %v736, %v734
      %v931 = vpack.c.b16 %v739, %v737
      %v932 = vpack.c.b16 %v740, %v738
      %v933 = vpack.c.b16 %v743, %v741
      %v934 = vpack.c.b16 %v744, %v742
      %v935 = vpack.c.b16 %v747, %v745
      %v936 = vpack.c.b16 %v748, %v746
      %v937 = vpack.c.b16 %v751, %v749
      %v938 = vpack.c.b16 %v752, %v750
      %v939 = vpack.c.b16 %v755, %v753
      %v940 = vpack.c.b16 %v756, %v754
      %v941 = vpack.c.b16 %v759, %v757
      %v942 = vpack.c.b16 %v760, %v758
      %v943 = vpack.c.b16 %v763, %v761
      %v944 = vpack.c.b16 %v764, %v762
      %v945 = vpack.c.b16 %v767, %v765
      %v946 = vpack.c.b16 %v768, %v766
      %v947 = vpack.c.b16 %v771, %v769
      %v948 = vpack.c.b16 %v772, %v770
      %v949 = vpack.c.b16 %v775, %v773
      %v950 = vpack.c.b16 %v776, %v774
      %v951 = vpack.c.b16 %v779, %v777
      %v952 = vpack.c.b16 %v780, %v778
      %v953 = vpack.c.b16 %v783, %v781
      %v954 = vpack.c.b16 %v784, %v782
      %v955 = vpack.c.b16 %v787, %v785
      %v956 = vpack.c.b16 %v788, %v786
      %v957 = vpack.c.b16 %v791, %v789
      %v958 = vpack.c.b16 %v792, %v790
      %v959 = vpack.c.b16 %v795, %v793
      %v960 = vpack.c.b16 %v796, %v794
      %v961 = vpack.c.b16 %v799, %v797
      %v962 = vpack.c.b16 %v800, %v798
      %v963 = vpack.c.b16 %v803, %v801
      %v964 = vpack.c.b16 %v804, %v802
      %v965 = vpack.c.b16 %v807, %v805
      %v966 = vpack.c.b16 %v808, %v806
      %v967 = vpack.c.b16 %v811, %v809
      %v968 = vpack.c.b16 %v812, %v810
      %v969 = vpack.c.b16 %v815, %v813
      %v970 = vpack.c.b16 %v816, %v814
      %v971 = vpack.c.b16 %v819, %v817
      %v972 = vpack.c.b16 %v820, %v818
      %v973 = vpack.c.b16 %v823, %v821
      %v974 = vpack.c.b16 %v824, %v822
      %v975 = vpack.c.b16 %v827, %v825
      %v976 = vpack.c.b16 %v828, %v826
      %v977 = vpack.c.b16 %v831, %v829
      %v978 = vpack.c.b16 %v832, %v830
      %v979 = vpack.c.b16 %v835, %v833
      %v980 = vpack.c.b16 %v836, %v834
      %1125 = vmatprep.subr.bf16.mxu0 %v838
      %1126 = vmatpush1.bf16.msra.mxu0 %v837
      %1127 = vmatprep.subr.bf16.mxu0 %v840
      %1128 = vmatpush1.bf16.msra.mxu0 %v839
      %1129 = vmatprep.subr.bf16.mxu0 %v842
      %1130 = vmatpush1.bf16.msra.mxu0 %v841
      %1131 = vmatprep.subr.bf16.mxu0 %v844
      %1132 = vmatpush1.bf16.msra.mxu0 %v843
      %1133 = vmatprep.subr.bf16.mxu0 %v846
      %1134 = vmatpush1.bf16.msra.mxu0 %v845
      %1135 = vmatprep.subr.bf16.mxu0 %v848
      %1136 = vmatpush1.bf16.msra.mxu0 %v847
      %1137 = vmatprep.subr.bf16.mxu0 %v850
      %1138 = vmatpush1.bf16.msra.mxu0 %v849
      %1139 = vmatprep.subr.bf16.mxu0 %v852
      %1140 = vmatpush1.bf16.msra.mxu0 %v851
      %1141 = vmatprep.subr.bf16.mxu0 %v854
      %1142 = vmatpush1.bf16.msra.mxu0 %v853
      %1143 = vmatprep.subr.bf16.mxu0 %v856
      %1144 = vmatpush1.bf16.msra.mxu0 %v855
      %1145 = vmatprep.subr.bf16.mxu0 %v858
      %1146 = vmatpush1.bf16.msra.mxu0 %v857
      %1147 = vmatprep.subr.bf16.mxu0 %v860
      %1148 = vmatpush1.bf16.msra.mxu0 %v859
      %1149 = vmatprep.subr.bf16.mxu0 %v862
      %1150 = vmatpush1.bf16.msra.mxu0 %v861
      %1151 = vmatprep.subr.bf16.mxu0 %v864
      %1152 = vmatpush1.bf16.msra.mxu0 %v863
      %1153 = vmatprep.subr.bf16.mxu0 %v866
      %1154 = vmatpush1.bf16.msra.mxu0 %v865
      %1155 = vmatprep.subr.bf16.mxu0 %v868
      %1156 = vmatpush1.bf16.msra.mxu0 %v867
      %1157 = vmatprep.mubr.bf16.mxu0 %v388
      %1158 = vmatmul.mubr.bf16.gmra.mrb[0].mxu0 %v387
      %v1159 = vpop.f32.mrb[0].mxu0
      %v1160 = vadd.f32 0.0, %v1159
      %v1161 = vpop.f32.mrb[0].mxu0
      %v1162 = vadd.f32 0.0, %v1161
      %v1163 = vpop.f32.mrb[0].mxu0
      %v1164 = vpop.f32.mrb[0].mxu0
      %1165 = vdwg.mxu0
      %1166 = vmatprep.subr.bf16.mxu0 %v870
      %1167 = vmatpush1.bf16.msra.mxu0 %v869
      %1168 = vmatprep.subr.bf16.mxu0 %v872
      %1169 = vmatpush1.bf16.msra.mxu0 %v871
      %1170 = vmatprep.subr.bf16.mxu0 %v874
      %1171 = vmatpush1.bf16.msra.mxu0 %v873
      %1172 = vmatprep.subr.bf16.mxu0 %v876
      %1173 = vmatpush1.bf16.msra.mxu0 %v875
      %1174 = vmatprep.subr.bf16.mxu0 %v878
      %1175 = vmatpush1.bf16.msra.mxu0 %v877
      %1176 = vmatprep.subr.bf16.mxu0 %v880
      %1177 = vmatpush1.bf16.msra.mxu0 %v879
      %1178 = vmatprep.subr.bf16.mxu0 %v882
      %1179 = vmatpush1.bf16.msra.mxu0 %v881
      %1180 = vmatprep.subr.bf16.mxu0 %v884
      %1181 = vmatpush1.bf16.msra.mxu0 %v883
      %1182 = vmatprep.subr.bf16.mxu0 %v886
      %1183 = vmatpush1.bf16.msra.mxu0 %v885
      %1184 = vmatprep.subr.bf16.mxu0 %v888
      %1185 = vmatpush1.bf16.msra.mxu0 %v887
      %1186 = vmatprep.subr.bf16.mxu0 %v890
      %1187 = vmatpush1.bf16.msra.mxu0 %v889
      %1188 = vmatprep.subr.bf16.mxu0 %v892
      %1189 = vmatpush1.bf16.msra.mxu0 %v891
      %1190 = vmatprep.subr.bf16.mxu0 %v894
      %1191 = vmatpush1.bf16.msra.mxu0 %v893
      %1192 = vmatprep.subr.bf16.mxu0 %v896
      %1193 = vmatpush1.bf16.msra.mxu0 %v895
      %1194 = vmatprep.subr.bf16.mxu0 %v898
      %1195 = vmatpush1.bf16.msra.mxu0 %v897
      %1196 = vmatprep.subr.bf16.mxu0 %v900
      %1197 = vmatpush1.bf16.msra.mxu0 %v899
      %1198 = vmatprep.mubr.bf16.mxu0 %v390
      %1199 = vmatmul.mubr.bf16.gmra.mrb[0].mxu0 %v389
      %v1200 = vpop.f32.mrb[0].mxu0
      %v1201 = vadd.f32 %v1160, %v1200
      %v1202 = vpop.f32.mrb[0].mxu0
      %v1203 = vadd.f32 %v1162, %v1202
      %v1204 = vpop.f32.mrb[0].mxu0
      %v1205 = vpop.f32.mrb[0].mxu0
      %1206 = vdwg.mxu0
      %1207 = vmatprep.subr.bf16.mxu0 %v902
      %1208 = vmatpush1.bf16.msra.mxu0 %v901
      %1209 = vmatprep.subr.bf16.mxu0 %v904
      %1210 = vmatpush1.bf16.msra.mxu0 %v903
      %1211 = vmatprep.subr.bf16.mxu0 %v906
      %1212 = vmatpush1.bf16.msra.mxu0 %v905
      %1213 = vmatprep.subr.bf16.mxu0 %v908
      %1214 = vmatpush1.bf16.msra.mxu0 %v907
      %1215 = vmatprep.subr.bf16.mxu0 %v910
      %1216 = vmatpush1.bf16.msra.mxu0 %v909
      %1217 = vmatprep.subr.bf16.mxu0 %v912
      %1218 = vmatpush1.bf16.msra.mxu0 %v911
      %1219 = vmatprep.subr.bf16.mxu0 %v914
      %1220 = vmatpush1.bf16.msra.mxu0 %v913
      %1221 = vmatprep.subr.bf16.mxu0 %v916
      %1222 = vmatpush1.bf16.msra.mxu0 %v915
      %1223 = vmatprep.subr.bf16.mxu0 %v918
      %1224 = vmatpush1.bf16.msra.mxu0 %v917
      %1225 = vmatprep.subr.bf16.mxu0 %v920
      %1226 = vmatpush1.bf16.msra.mxu0 %v919
      %1227 = vmatprep.subr.bf16.mxu0 %v922
      %1228 = vmatpush1.bf16.msra.mxu0 %v921
      %1229 = vmatprep.subr.bf16.mxu0 %v924
      %1230 = vmatpush1.bf16.msra.mxu0 %v923
      %1231 = vmatprep.subr.bf16.mxu0 %v926
      %1232 = vmatpush1.bf16.msra.mxu0 %v925
      %1233 = vmatprep.subr.bf16.mxu0 %v928
      %1234 = vmatpush1.bf16.msra.mxu0 %v927
      %1235 = vmatprep.subr.bf16.mxu0 %v930
      %1236 = vmatpush1.bf16.msra.mxu0 %v929
      %1237 = vmatprep.subr.bf16.mxu0 %v932
      %1238 = vmatpush1.bf16.msra.mxu0 %v931
      %1239 = vmatprep.mubr.bf16.mxu0 %v392
      %1240 = vmatmul.mubr.bf16.gmra.mrb[0].mxu0 %v391
      %v1241 = vpop.f32.mrb[0].mxu0
      %v1242 = vadd.f32 %v1201, %v1241
      %v1243 = vpop.f32.mrb[0].mxu0
      %v1244 = vadd.f32 %v1203, %v1243
      %v1245 = vpop.f32.mrb[0].mxu0
      %v1246 = vpop.f32.mrb[0].mxu0
      %1247 = vdwg.mxu0
      %1248 = vmatprep.subr.bf16.mxu0 %v934
      %1249 = vmatpush1.bf16.msra.mxu0 %v933
      %1250 = vmatprep.subr.bf16.mxu0 %v936
      %1251 = vmatpush1.bf16.msra.mxu0 %v935
      %1252 = vmatprep.subr.bf16.mxu0 %v938
      %1253 = vmatpush1.bf16.msra.mxu0 %v937
      %1254 = vmatprep.subr.bf16.mxu0 %v940
      %1255 = vmatpush1.bf16.msra.mxu0 %v939
      %1256 = vmatprep.subr.bf16.mxu0 %v942
      %1257 = vmatpush1.bf16.msra.mxu0 %v941
      %1258 = vmatprep.subr.bf16.mxu0 %v944
      %1259 = vmatpush1.bf16.msra.mxu0 %v943
      %1260 = vmatprep.subr.bf16.mxu0 %v946
      %1261 = vmatpush1.bf16.msra.mxu0 %v945
      %1262 = vmatprep.subr.bf16.mxu0 %v948
      %1263 = vmatpush1.bf16.msra.mxu0 %v947
      %1264 = vmatprep.subr.bf16.mxu0 %v950
      %1265 = vmatpush1.bf16.msra.mxu0 %v949
      %1266 = vmatprep.subr.bf16.mxu0 %v952
      %1267 = vmatpush1.bf16.msra.mxu0 %v951
      %1268 = vmatprep.subr.bf16.mxu0 %v954
      %1269 = vmatpush1.bf16.msra.mxu0 %v953
      %1270 = vmatprep.subr.bf16.mxu0 %v956
      %1271 = vmatpush1.bf16.msra.mxu0 %v955
      %1272 = vmatprep.subr.bf16.mxu0 %v958
      %1273 = vmatpush1.bf16.msra.mxu0 %v957
      %1274 = vmatprep.subr.bf16.mxu0 %v960
      %1275 = vmatpush1.bf16.msra.mxu0 %v959
      %1276 = vmatprep.subr.bf16.mxu0 %v962
      %1277 = vmatpush1.bf16.msra.mxu0 %v961
      %1278 = vmatprep.subr.bf16.mxu0 %v964
      %1279 = vmatpush1.bf16.msra.mxu0 %v963
      %1280 = vmatprep.mubr.bf16.mxu0 %v394
      %1281 = vmatmul.mubr.bf16.gmra.mrb[0].mxu0 %v393
      %v1282 = vpop.f32.mrb[0].mxu0
      %v1283 = vadd.f32 %v1242, %v1282
      %v1284 = vpop.f32.mrb[0].mxu0
      %v1285 = vadd.f32 %v1244, %v1284
      %v1286 = vpop.f32.mrb[0].mxu0
      %v1287 = vpop.f32.mrb[0].mxu0
      %1288 = vdwg.mxu0
      %1289 = vmatprep.subr.bf16.mxu0 %v966
      %1290 = vmatpush1.bf16.msra.mxu0 %v965
      %1291 = vmatprep.subr.bf16.mxu0 %v968
      %1292 = vmatpush1.bf16.msra.mxu0 %v967
      %1293 = vmatprep.subr.bf16.mxu0 %v970
      %1294 = vmatpush1.bf16.msra.mxu0 %v969
      %1295 = vmatprep.subr.bf16.mxu0 %v972
      %1296 = vmatpush1.bf16.msra.mxu0 %v971
      %1297 = vmatprep.subr.bf16.mxu0 %v974
      %1298 = vmatpush1.bf16.msra.mxu0 %v973
      %1299 = vmatprep.subr.bf16.mxu0 %v976
      %1300 = vmatpush1.bf16.msra.mxu0 %v975
      %1301 = vmatprep.subr.bf16.mxu0 %v978
      %1302 = vmatpush1.bf16.msra.mxu0 %v977
      %1303 = vmatprep.subr.bf16.mxu0 %v980
      %1304 = vmatpush1.bf16.msra.mxu0 %v979
      %1305 = vmatprep.subr.bf16.mxu0 0
      %1306 = vmatpush1.bf16.msra.mxu0 0
      %1307 = vmatprep.subr.bf16.mxu0 0
      %1308 = vmatpush1.bf16.msra.mxu0 0
      %1309 = vmatprep.subr.bf16.mxu0 0
      %1310 = vmatpush1.bf16.msra.mxu0 0
      %1311 = vmatprep.subr.bf16.mxu0 0
      %1312 = vmatpush1.bf16.msra.mxu0 0
      %1313 = vmatprep.subr.bf16.mxu0 0
      %1314 = vmatpush1.bf16.msra.mxu0 0
      %1315 = vmatprep.subr.bf16.mxu0 0
      %1316 = vmatpush1.bf16.msra.mxu0 0
      %1317 = vmatprep.subr.bf16.mxu0 0
      %1318 = vmatpush1.bf16.msra.mxu0 0
      %1319 = vmatprep.subr.bf16.mxu0 0
      %1320 = vmatpush1.bf16.msra.mxu0 0
      %1321 = vmatprep.mubr.bf16.mxu0 0
      %1322 = vmatmul.mubr.bf16.gmra.mrb[0].mxu0 %v395
      %v1323 = vpop.f32.mrb[0].mxu0
      %v1324 = vadd.f32 %v1283, %v1323
      %v1325 = vpop.f32.mrb[0].mxu0
      %v1326 = vadd.f32 %v1285, %v1325
      %v1327 = vpop.f32.mrb[0].mxu0
      %v1328 = vpop.f32.mrb[0].mxu0
      %1329 = vdwg.mxu0
      %v1330 = vld [vmem:[%s2] sm:$0xff]
      %1332 = vset.pattern.permute.xlu0 0
      %1333 = vperm.xlu0 %1332, %v1330
      %v1334 = vpop.permute.xlu0 %1333
      %v1336 = vmul.f32 %v1324, %v1334
      %v1337 = vmul.f32 %v1326, %v1334
      %v1338 = vrot.slane %v1336, 4
      %v1339 = vadd.f32 %v1336, %v1338
      %v1340 = vrot.slane %v1339, 2
      %v1341 = vadd.f32 %v1339, %v1340
      %v1342 = vrot.slane %v1341, 1
      %v1343 = vadd.f32 %v1341, %v1342
      %v1344 = vrot.slane %v1337, 4
      %v1345 = vadd.f32 %v1337, %v1344
      %v1346 = vrot.slane %v1345, 2
      %v1347 = vadd.f32 %v1345, %v1346
      %v1348 = vrot.slane %v1347, 1
      %v1349 = vadd.f32 %v1347, %v1348
      %v1350 = vmul.f32 %v1336, %v1324
      %v1351 = vmul.f32 %v1337, %v1326
      %v1352 = vrot.slane %v1350, 4
      %v1353 = vadd.f32 %v1350, %v1352
      %v1354 = vrot.slane %v1353, 2
      %v1355 = vadd.f32 %v1353, %v1354
      %v1356 = vrot.slane %v1355, 1
      %v1357 = vadd.f32 %v1355, %v1356
      %v1358 = vrot.slane %v1351, 4
      %v1359 = vadd.f32 %v1351, %v1358
      %v1360 = vrot.slane %v1359, 2
      %v1361 = vadd.f32 %v1359, %v1360
      %v1362 = vrot.slane %v1361, 1
      %v1363 = vadd.f32 %v1361, %v1362
      %v1364 = vmul.f32 %v1343, %v1343
      %v1365 = vmul.f32 %v1349, %v1349
      %v1366 = vsub.f32 %v1357, %v1364
      %v1367 = vsub.f32 %v1363, %v1365
      %v1368 = vmax.f32 %v1366, 0.0
      %v1369 = vmax.f32 %v1367, 0.0
      %v1370 = vsub.f32 %v1324, %v1343
      %v1371 = vsub.f32 %v1326, %v1349
      %v1372 = vadd.f32 %v1368, 1e-05
      %v1373 = vadd.f32 %v1369, 1e-05
      %v1374 = vrsqrt.pop %v1372
      %v1375 = vrsqrt.pop %v1373
      %v1376 = vmul.f32 %v1370, %v1374
      %v1377 = vmul.f32 %v1371, %v1375
      %vm1378 = vcmp.ge.f32.partialorder %v1376, 0.0
      %vm1379 = vcmp.ge.f32.partialorder %v1377, 0.0
      %v1380 = vmul.f32 %v1376, 0.2
      %v1381 = vmul.f32 %v1377, 0.2
      %v1382 = vsel %vm1378, %v1376, %v1380
      %v1383 = vsel %vm1379, %v1377, %v1381
      %v1384 = vpack.c.bf16 %v1382, %v1382
      %v1385 = vpack.c.bf16 %v1383, %v1383
      %v1386 = vld [vmem:[%s3] sm:$0xf]
      %v1387 = vld [vmem:[%s3 + $0x4] sm:$0xf]
      %v1388 = vld [vmem:[%s3 + $0x8] sm:$0xf]
      %v1389 = vld [vmem:[%s3 + $0xc] sm:$0xf]
      %v1390 = vld [vmem:[%s3 + $0x10] sm:$0xf]
      %v1391 = vld [vmem:[%s3 + $0x14] sm:$0xf]
      %v1392 = vld [vmem:[%s3 + $0x18] sm:$0xf]
      %v1393 = vld [vmem:[%s3 + $0x1c] sm:$0xf]
      %v1394 = vld [vmem:[%s3 + $0x20] sm:$0xf]
      %v1395 = vld [vmem:[%s3 + $0x24] sm:$0xf]
      %v1396 = vld [vmem:[%s3 + $0x28] sm:$0xf]
      %v1397 = vld [vmem:[%s3 + $0x2c] sm:$0xf]
      %v1398 = vld [vmem:[%s3 + $0x30] sm:$0xf]
      %v1399 = vld [vmem:[%s3 + $0x34] sm:$0xf]
      %v1400 = vld [vmem:[%s3 + $0x38] sm:$0xf]
      %v1401 = vld [vmem:[%s3 + $0x3c] sm:$0xf]
      %v1402 = vld [vmem:[%s3 + $0x40] sm:$0xf]
      %v1403 = vld [vmem:[%s3 + $0x44] sm:$0xf]
      %v1404 = vld [vmem:[%s3 + $0x48] sm:$0xf]
      %v1405 = vld [vmem:[%s3 + $0x4c] sm:$0xf]
      %v1406 = vld [vmem:[%s3 + $0x50] sm:$0xf]
      %v1407 = vld [vmem:[%s3 + $0x54] sm:$0xf]
      %v1408 = vld [vmem:[%s3 + $0x58] sm:$0xf]
      %v1409 = vld [vmem:[%s3 + $0x5c] sm:$0xf]
      %v1410 = vld [vmem:[%s3 + $0x60] sm:$0xf]
      %v1411 = vld [vmem:[%s3 + $0x64] sm:$0xf]
      %v1412 = vld [vmem:[%s3 + $0x68] sm:$0xf]
      %v1413 = vld [vmem:[%s3 + $0x6c] sm:$0xf]
      %v1414 = vld [vmem:[%s3 + $0x70] sm:$0xf]
      %v1415 = vld [vmem:[%s3 + $0x74] sm:$0xf]
      %v1416 = vld [vmem:[%s3 + $0x78] sm:$0xf]
      %v1417 = vld [vmem:[%s3 + $0x7c] sm:$0xf]
      %v1418 = vld [vmem:[%s4] sm:$0x1]
      %v1420 = vlaneseq
      %v1421 = vshrl.u32 %v1420, 7
      %v1422 = vsub.s32 0, %v1421
      %v1423 = vrot.slane %v1418, %v1422
      %v1457 = vunpack.c.l.b16 %v1386
      %v1458 = vunpack.c.l.b16 %v1387
      %v1459 = vunpack.c.l.b16 %v1388
      %v1460 = vunpack.c.l.b16 %v1389
      %v1461 = vunpack.c.l.b16 %v1390
      %v1462 = vunpack.c.l.b16 %v1391
      %v1463 = vunpack.c.l.b16 %v1392
      %v1464 = vunpack.c.l.b16 %v1393
      %v1465 = vunpack.c.l.b16 %v1394
      %v1466 = vunpack.c.l.b16 %v1395
      %v1467 = vunpack.c.l.b16 %v1396
      %v1468 = vunpack.c.l.b16 %v1397
      %v1469 = vunpack.c.l.b16 %v1398
      %v1470 = vunpack.c.l.b16 %v1399
      %v1471 = vunpack.c.l.b16 %v1400
      %v1472 = vunpack.c.l.b16 %v1401
      %v1473 = vunpack.c.l.b16 %v1402
      %v1474 = vunpack.c.l.b16 %v1403
      %v1475 = vunpack.c.l.b16 %v1404
      %v1476 = vunpack.c.l.b16 %v1405
      %v1477 = vunpack.c.l.b16 %v1406
      %v1478 = vunpack.c.l.b16 %v1407
      %v1479 = vunpack.c.l.b16 %v1408
      %v1480 = vunpack.c.l.b16 %v1409
      %v1481 = vunpack.c.l.b16 %v1410
      %v1482 = vunpack.c.l.b16 %v1411
      %v1483 = vunpack.c.l.b16 %v1412
      %v1484 = vunpack.c.l.b16 %v1413
      %v1485 = vunpack.c.l.b16 %v1414
      %v1486 = vunpack.c.l.b16 %v1415
      %v1487 = vunpack.c.l.b16 %v1416
      %v1488 = vunpack.c.l.b16 %v1417
      %v1489 = vpack.c.b16 %v1458, %v1457
      %v1490 = vpack.c.b16 %v1460, %v1459
      %v1491 = vpack.c.b16 %v1462, %v1461
      %v1492 = vpack.c.b16 %v1464, %v1463
      %v1493 = vpack.c.b16 %v1466, %v1465
      %v1494 = vpack.c.b16 %v1468, %v1467
      %v1495 = vpack.c.b16 %v1470, %v1469
      %v1496 = vpack.c.b16 %v1472, %v1471
      %v1497 = vpack.c.b16 %v1474, %v1473
      %v1498 = vpack.c.b16 %v1476, %v1475
      %v1499 = vpack.c.b16 %v1478, %v1477
      %v1500 = vpack.c.b16 %v1480, %v1479
      %v1501 = vpack.c.b16 %v1482, %v1481
      %v1502 = vpack.c.b16 %v1484, %v1483
      %v1503 = vpack.c.b16 %v1486, %v1485
      %v1504 = vpack.c.b16 %v1488, %v1487
      %1521 = vmatprep.subr.bf16.mxu0 0
      %1522 = vmatpush1.bf16.msra.mxu0 %v1489
      %1523 = vmatprep.subr.bf16.mxu0 0
      %1524 = vmatpush1.bf16.msra.mxu0 %v1490
      %1525 = vmatprep.subr.bf16.mxu0 0
      %1526 = vmatpush1.bf16.msra.mxu0 %v1491
      %1527 = vmatprep.subr.bf16.mxu0 0
      %1528 = vmatpush1.bf16.msra.mxu0 %v1492
      %1529 = vmatprep.subr.bf16.mxu0 0
      %1530 = vmatpush1.bf16.msra.mxu0 %v1493
      %1531 = vmatprep.subr.bf16.mxu0 0
      %1532 = vmatpush1.bf16.msra.mxu0 %v1494
      %1533 = vmatprep.subr.bf16.mxu0 0
      %1534 = vmatpush1.bf16.msra.mxu0 %v1495
      %1535 = vmatprep.subr.bf16.mxu0 0
      %1536 = vmatpush1.bf16.msra.mxu0 %v1496
      %1537 = vmatprep.subr.bf16.mxu0 0
      %1538 = vmatpush1.bf16.msra.mxu0 %v1497
      %1539 = vmatprep.subr.bf16.mxu0 0
      %1540 = vmatpush1.bf16.msra.mxu0 %v1498
      %1541 = vmatprep.subr.bf16.mxu0 0
      %1542 = vmatpush1.bf16.msra.mxu0 %v1499
      %1543 = vmatprep.subr.bf16.mxu0 0
      %1544 = vmatpush1.bf16.msra.mxu0 %v1500
      %1545 = vmatprep.subr.bf16.mxu0 0
      %1546 = vmatpush1.bf16.msra.mxu0 %v1501
      %1547 = vmatprep.subr.bf16.mxu0 0
      %1548 = vmatpush1.bf16.msra.mxu0 %v1502
      %1549 = vmatprep.subr.bf16.mxu0 0
      %1550 = vmatpush1.bf16.msra.mxu0 %v1503
      %1551 = vmatprep.subr.bf16.mxu0 0
      %1552 = vmatpush1.bf16.msra.mxu0 %v1504
      %1553 = vmatprep.mubr.bf16.mxu0 %v1385
      %1554 = vmatmul.mubr.bf16.gmra.mrb[0].mxu0 %v1384
      %v1555 = vpop.f32.mrb[0].mxu0
      %v1556 = vadd.f32 %v1423, %v1555
      %v1557 = vpop.f32.mrb[0].mxu0
      %v1558 = vpop.f32.mrb[0].mxu0
      %v1559 = vpop.f32.mrb[0].mxu0
      %1560 = vdwg.mxu0
      %1561 = vst [vmem:[%s222] sm:$0xff] %v1556
      %p1562 = scmp.lt.s32.totalorder %s16, 1
      %s1563 = scalar_select %p1562, %s16, 1
      %s1564 = smul.addr %s1563, 8
      %s1565 = scalar_lea.vmem %s5, %s1564
      // Predicated region
      $region41: #{discriminator_forward.5} parent=39 // pred_check
        %p1566 = pneg %p144
      $region42: #{discriminator_forward.5} parent=39 // pred_check_branch
        %1568 = sbr.rel (%p1566) target = $region44
      $region43: #{discriminator_forward.5} parent=39 // pred_region
        _
      $region44: #{discriminator_forward.5} parent=39 // pred_fallthru
        _
    $region40: #{discriminator_forward.5} parent=5 // pred_fallthru
      _
    %p1569 = scmp.le.s32.totalorder 2, %s11
    // Predicated region
    $region45: #{discriminator_forward.5} parent=5 // pred_check
      %p1570 = pneg %p1569
    $region46: #{discriminator_forward.5} parent=5 // pred_check_branch
      %1572 = sbr.rel (%p1570) target = $region48
    $region47: #{discriminator_forward.5} parent=5 // pred_region
      %s1573 = ssub.s32 %s11, 2
      // Predicated region
      $region49: #{discriminator_forward.5} parent=47 // pred_check
        %p1574 = pneg %p150
      $region50: #{discriminator_forward.5} parent=47 // pred_check_branch
        %1576 = sbr.rel (%p1574) target = $region52
      $region51: #{discriminator_forward.5} parent=47 // pred_region
        %p1577 = scmp.lt.s32.totalorder %s17, 1
        %s1578 = scalar_select %p1577, %s17, 1
        %s1579 = smul.addr %s1578, 8
        %s1580 = scalar_lea.vmem %s5, %s1579
      $region52: #{discriminator_forward.5} parent=47 // pred_fallthru
        _
    $region48: #{discriminator_forward.5} parent=5 // pred_fallthru
      _
  $region6: #{discriminator_forward.5} parent=0 // loop_footer
    %s15 = sadd.s32 1, %s11
  $region7: #{discriminator_forward.5} parent=0 // loop_footer_branch
    %10 = sbr.rel target = $region3
  $region8: #{discriminator_forward.5} parent=0 // loop_exit
    _

</llo_original>
